<compile_context>
chip_gen: v7x
topology: tpu7x:2x2x1
jax: 0.10.0
libtpu: 0.0.40
codegen_flags: <defaults>
</compile_context>

<pallas_src>
import functools

import jax
import jax.numpy as jnp
import numpy as np
from jax.experimental import pallas as pl
from jax.experimental.pallas import tpu as pltpu


def _encoder_layer_kernel(x_ref,
                          g1_ref, be1_ref, wqkv_ref, wo_ref, bo_ref,
                          g2_ref, be2_ref, w1_ref, b1_ref, w2_ref, b2_ref,
                          o_ref,
                          *, heads, eps):
    """One grid step == Bt batch elements, fully fused in VMEM."""
    Bt, N, E = x_ref.shape
    M = Bt * N
    D = E // heads
    work_dtype = x_ref.dtype

    x = x_ref[...].reshape(M, E)                       # (M, E) native dtype
    xf = x.astype(jnp.float32)

    # ---- PreNorm #1 (nn.LayerNorm, eps=1e-5, affine) -------------------------
    mu = jnp.mean(xf, axis=-1, keepdims=True)
    xc = xf - mu
    var = jnp.mean(xc * xc, axis=-1, keepdims=True)
    xn = xc * jax.lax.rsqrt(var + eps)
    xn = xn * g1_ref[...].astype(jnp.float32) + be1_ref[...].astype(jnp.float32)
    xn = xn.astype(work_dtype)

    # ---- to_qkv: native-dtype operands, f32 accumulation, downcast once ------
    # (attention scale is already folded into the Q columns of W_qkv).
    qkv = jnp.dot(xn, wqkv_ref[...],
                  preferred_element_type=jnp.float32).astype(work_dtype)   # (M, 3E)

    # ---- multi-head attention: one batched matmul over g = heads*Bt ----------
    def heads_view(off):
        # columns are laid out '(h d)'; stack per-head (Bt, N, D) blocks along a
        # new leading batch axis (static lane slices + leading-axis concat only).
        return jnp.concatenate(
            [qkv[:, off + h * D: off + (h + 1) * D].reshape(Bt, N, D)
             for h in range(heads)], axis=0)                               # (g, N, D)

    q = heads_view(0)
    k = heads_view(E)
    v = heads_view(2 * E)

    s = jnp.einsum("gnd,gmd->gnm", q, k,
                   preferred_element_type=jnp.float32)                     # (g, N, N) f32
    s = s - jnp.max(s, axis=-1, keepdims=True)
    p = jnp.exp(s)
    p = p * pl.reciprocal(jnp.sum(p, axis=-1, keepdims=True), approx=True)

    oh = jnp.einsum("gnm,gmd->gnd", p.astype(work_dtype), v,
                    preferred_element_type=jnp.float32)                    # (g, N, D) f32

    # Re-pack to 'b n (h d)' in registers (lane-dense when D % 128 == 0).
    attn = jnp.concatenate(
        [oh[h * Bt:(h + 1) * Bt].reshape(M, D) for h in range(heads)],
        axis=-1).astype(work_dtype)                                        # (M, E)

    # ---- to_out projection + residual (Dropout(p=0) == identity) -------------
    attn_out = jnp.dot(attn, wo_ref[...], preferred_element_type=jnp.float32)
    y = xf + attn_out + bo_ref[...].astype(jnp.float32)                    # (M, E) f32

    # ---- PreNorm #2 + FeedForward (Linear -> GELU -> Linear) + residual ------
    mu2 = jnp.mean(y, axis=-1, keepdims=True)
    yc = y - mu2
    var2 = jnp.mean(yc * yc, axis=-1, keepdims=True)
    yn = yc * jax.lax.rsqrt(var2 + eps)
    yn = yn * g2_ref[...].astype(jnp.float32) + be2_ref[...].astype(jnp.float32)
    yn = yn.astype(work_dtype)

    h1 = (jnp.dot(yn, w1_ref[...], preferred_element_type=jnp.float32)
          + b1_ref[...].astype(jnp.float32)).astype(work_dtype)            # (M, H)
    # GELU via tanh approximation (EUP), evaluated in the working dtype
    # (bf16 on v6e/v7x inputs).  PyTorch nn.GELU() uses exact erf; max abs
    # difference < ~1e-3, inside the test tolerance.
    # TODO(synk): exact-erf GELU if bit-accuracy to nn.GELU() is required.
    c0 = 0.7978845608028654   # sqrt(2/pi)
    g = 0.5 * h1 * (1.0 + jnp.tanh(c0 * (h1 + 0.044715 * h1 * h1 * h1)))

    ff = (jnp.dot(g, w2_ref[...], preferred_element_type=jnp.float32)
          + b2_ref[...].astype(jnp.float32))

    out = y + ff
    o_ref[...] = out.reshape(Bt, N, E).astype(o_ref.dtype)


# ------------------------- capacity-aware tiling helpers ----------------------
def _vmem_capacity_bytes():
    try:
        return int(pltpu.get_tpu_info().vmem_capacity_bytes)
    except Exception:
        return 128 << 20          # v5e/v6e physical VMEM


def _mxu_target_rows():
    # v5e's MXU is 128-deep, so M=128 already fills it; v6e/v7x are 256-deep.
    try:
        kind = jax.devices()[0].device_kind.lower()
    except Exception:
        return 256
    return 128 if any(v in kind for v in ("v2", "v3", "v4", "v5")) else 256


def _estimate_vmem_bytes(Bt, N, E, H, heads, itemsize):
    """Upper bound on in-kernel VMEM for one fused layer tile."""
    M = Bt * N
    f32 = 4
    io = 2 * 2 * M * E * itemsize                               # double-buffered x / out tiles
    weights = (4 * E * E + 2 * E * H + 6 * E + H) * itemsize    # single-buffered (Buffered(1))
    interm = (3 * M * E * f32                   # qkv f32 accumulator (before downcast)
              + 3 * M * E * itemsize            # head-major q/k/v copies
              + 2 * heads * Bt * N * N * f32    # scores + probabilities (one live set)
              + 3 * M * E * f32                 # attn out, residual, normalized acts
              + 2 * M * H * f32)                # FFN hidden + GELU
    return io + weights + interm


def _choose_batch_tile(B, N, E, H, heads, itemsize, budget, target_rows):
    """Pick a batch tile Bt (divisor of B) that fits the VMEM budget.

    Prefers the smallest Bt with Bt*N >= target_rows (fills the MXU M dim and
    amortizes the ~0.35us/step pipeline overhead) while keeping the grid
    extent B//Bt >= 2 so v7x megacore can shard the 'parallel' batch axis.
    """
    divisors = [d for d in range(1, B + 1) if B % d == 0]
    fits = [d for d in divisors
            if _estimate_vmem_bytes(d, N, E, H, heads, itemsize) <= budget]
    if not fits:
        return 1
    meets = [d for d in fits if d * N >= target_rows]
    if meets:
        two_core = [d for d in meets if B // d >= 2]
        return min(two_core) if two_core else min(meets)
    two_core = [d for d in fits if B // d >= 2]
    return max(two_core) if two_core else max(fits)


# --------------------------------- wrapper ------------------------------------
def transformer_encoder_layer(x, g1, be1, w_qkv, w_out, b_out,
                              g2, be2, w1, b1, w2, b2, *, heads, eps=1e-5):
    B, N, E = x.shape
    H = w1.shape[1]
    assert E % heads == 0, "emb_dim must be a multiple of heads"
    scale = (E // heads) ** (-0.5)

    # Fold the attention scale into the Q columns of W_qkv (weight transform
    # outside the kernel; under jit it is a one-time constant-folded op).
    w_qkv = jnp.concatenate([w_qkv[:, :E] * scale, w_qkv[:, E:]], axis=-1)

    itemsize = x.dtype.itemsize
    budget = max(_vmem_capacity_bytes() - (16 << 20), 32 << 20)
    Bt = _choose_batch_tile(B, N, E, H, heads, itemsize, budget, _mxu_target_rows())
    grid = (B // Bt,)
    est = _estimate_vmem_bytes(Bt, N, E, H, heads, itemsize)
    vmem_bytes = int(min(max(est + (8 << 20), 32 << 20), budget))

    # 1-D parameters as (1, dim) rows so they broadcast over (M, dim) tiles.
    row = lambda t: t.reshape(1, -1)
    g1, be1, b_out, g2, be2, b1, b2 = map(row, (g1, be1, b_out, g2, be2, b1, b2))

    kernel = functools.partial(_encoder_layer_kernel, heads=heads, eps=eps)

    def shared(shape):
        # Constant across the grid; Buffered(1) skips pointless double-buffering.
        idx = lambda b, _n=len(shape): (0,) * _n
        try:
            return pl.BlockSpec(shape, idx, pipeline_mode=pl.Buffered(1))
        except (AttributeError, TypeError):
            return pl.BlockSpec(shape, idx)

    # NOTE: for production configs keep E and E/heads multiples of 128 so all
    # stores are lane-dense; the E=32 demo keeps the module's native width.
    return pl.pallas_call(
        kernel,
        out_shape=jax.ShapeDtypeStruct((B, N, E), x.dtype),
        grid_spec=pltpu.PrefetchScalarGridSpec(
            num_scalar_prefetch=0,
            grid=grid,
            in_specs=[
                pl.BlockSpec((Bt, N, E), lambda b: (b, 0, 0)),   # x tile (Bt batch rows)
                shared((1, E)),          # ln1 gamma
                shared((1, E)),          # ln1 beta
                shared((E, 3 * E)),      # W_qkv (Q columns pre-scaled)
                shared((E, E)),          # W_out
                shared((1, E)),          # b_out
                shared((1, E)),          # ln2 gamma
                shared((1, E)),          # ln2 beta
                shared((E, H)),          # FFN W1
                shared((1, H)),          # FFN b1
                shared((H, E)),          # FFN W2
                shared((1, E)),          # FFN b2
            ],
            out_specs=pl.BlockSpec((Bt, N, E), lambda b: (b, 0, 0)),
        ),
        compiler_params=pltpu.CompilerParams(
            dimension_semantics=("parallel",),
            vmem_limit_bytes=vmem_bytes,
        ),
    )(x, g1, be1, w_qkv, w_out, b_out, g2, be2, w1, b1, w2, b2)


def transformer_encoder(x, layer_params, *, heads):
    """Mirrors TransformerEncoder.forward (mask=None, return_attn=False)."""
    # TODO(synk): collapse the depth loop into one pallas_call with a layer
    #             grid axis (or cross-call weight prefetch) to hide per-layer
    #             weight DMA in the weight-bound regime.
    for p in layer_params:
        x = transformer_encoder_layer(
            x, p["ln1_g"], p["ln1_b"], p["w_qkv"], p["w_out"], p["b_out"],
            p["ln2_g"], p["ln2_b"], p["w1"], p["b1"], p["w2"], p["b2"],
            heads=heads)
    return x


# ----------------------------- pure-JAX reference -----------------------------
def _layernorm_ref(x, g, b, eps=1e-5):
    mu = jnp.mean(x, axis=-1, keepdims=True)
    var = jnp.mean((x - mu) ** 2, axis=-1, keepdims=True)
    return (x - mu) / jnp.sqrt(var + eps) * g + b


def _mha_ref(x, w_qkv, w_out, b_out, *, heads):
    B, N, E = x.shape
    D = E // heads
    scale = D ** (-0.5)
    qkv = jnp.einsum("bne,ef->bnf", x, w_qkv)
    q, k, v = jnp.split(qkv, 3, axis=-1)
    to_heads = lambda t: t.reshape(B, N, heads, D).transpose(0, 2, 1, 3)
    q, k, v = map(to_heads, (q, k, v))
    attn = jax.nn.softmax(jnp.einsum("bhnd,bhmd->bhnm", q, k) * scale, axis=-1)
    out = jnp.einsum("bhnm,bhmd->bhnd", attn, v).transpose(0, 2, 1, 3).reshape(B, N, E)
    return jnp.einsum("bne,ef->bnf", out, w_out) + b_out


def transformer_encoder_reference(x, layer_params, *, heads):
    for p in layer_params:
        xn = _layernorm_ref(x, p["ln1_g"], p["ln1_b"])
        x = x + _mha_ref(xn, p["w_qkv"], p["w_out"], p["b_out"], heads=heads)
        yn = _layernorm_ref(x, p["ln2_g"], p["ln2_b"])
        h = jax.nn.gelu(yn @ p["w1"] + p["b1"], approximate=False)  # exact erf, like nn.GELU()
        x = x + (h @ p["w2"] + p["b2"])
    return x


if __name__ == "__main__":
    B, N, E, heads, mlp_dim, depth = 2, 8, 32, 4, 64, 2

    key = jax.random.PRNGKey(0)
    kx, *layer_keys = jax.random.split(key, depth + 1)

    x = jax.random.normal(kx, (B, N, E), dtype=jnp.float32)

    def init_layer(k):
        ks = jax.random.split(k, 11)
        s_e = 1.0 / float(np.sqrt(E))
        s_h = 1.0 / float(np.sqrt(mlp_dim))
        return {
            "ln1_g": 1.0 + 0.05 * jax.random.normal(ks[0], (E,), jnp.float32),
            "ln1_b": 0.05 * jax.random.normal(ks[1], (E,), jnp.float32),
            "w_qkv": s_e * jax.random.normal(ks[2], (E, 3 * E), jnp.float32),
            "w_out": s_e * jax.random.normal(ks[3], (E, E), jnp.float32),
            "b_out": 0.02 * jax.random.normal(ks[4], (E,), jnp.float32),
            "ln2_g": 1.0 + 0.05 * jax.random.normal(ks[5], (E,), jnp.float32),
            "ln2_b": 0.05 * jax.random.normal(ks[6], (E,), jnp.float32),
            "w1": s_e * jax.random.normal(ks[7], (E, mlp_dim), jnp.float32),
            "b1": 0.02 * jax.random.normal(ks[8], (mlp_dim,), jnp.float32),
            "w2": s_h * jax.random.normal(ks[9], (mlp_dim, E), jnp.float32),
            "b2": 0.02 * jax.random.normal(ks[10], (E,), jnp.float32),
        }

    params = [init_layer(k) for k in layer_keys]

    out = jax.block_until_ready(transformer_encoder(x, params, heads=heads))
    ref = jax.block_until_ready(
        transformer_encoder_reference(x, params, heads=heads))

    np.testing.assert_allclose(np.asarray(out), np.asarray(ref),
                               rtol=2e-2, atol=2e-2)
    print("KERNEL_OK")
</pallas_src>

<mosaic_0001>
module attributes {stable_mosaic.version = 11 : i64} {
  func.func @_encoder_layer_kernel(%arg0: i32, %arg1: memref<1x8x32xf32, #tpu.memory_space<vmem>>, %arg2: memref<1x32xf32, #tpu.memory_space<vmem>>, %arg3: memref<1x32xf32, #tpu.memory_space<vmem>>, %arg4: memref<32x96xf32, #tpu.memory_space<vmem>>, %arg5: memref<32x32xf32, #tpu.memory_space<vmem>>, %arg6: memref<1x32xf32, #tpu.memory_space<vmem>>, %arg7: memref<1x32xf32, #tpu.memory_space<vmem>>, %arg8: memref<1x32xf32, #tpu.memory_space<vmem>>, %arg9: memref<32x64xf32, #tpu.memory_space<vmem>>, %arg10: memref<1x64xf32, #tpu.memory_space<vmem>>, %arg11: memref<64x32xf32, #tpu.memory_space<vmem>>, %arg12: memref<1x32xf32, #tpu.memory_space<vmem>>, %arg13: memref<1x8x32xf32, #tpu.memory_space<vmem>>) attributes {dimension_semantics = [#tpu.dimension_semantics<parallel>], iteration_bounds = array<i64: 2>, scalar_prefetch = 0 : i64, scratch_operands = 0 : i64, tpu.core_type = #tpu.core_type<tc>, window_params = [{transform_indices = @transform_0, window_bounds = array<i64: 1, 8, 32>}, {pipeline_mode = #tpu.pipeline_mode<synchronous>, transform_indices = @transform_1, window_bounds = array<i64: 1, 32>}, {pipeline_mode = #tpu.pipeline_mode<synchronous>, transform_indices = @transform_2, window_bounds = array<i64: 1, 32>}, {pipeline_mode = #tpu.pipeline_mode<synchronous>, transform_indices = @transform_3, window_bounds = array<i64: 32, 96>}, {pipeline_mode = #tpu.pipeline_mode<synchronous>, transform_indices = @transform_4, window_bounds = array<i64: 32, 32>}, {pipeline_mode = #tpu.pipeline_mode<synchronous>, transform_indices = @transform_5, window_bounds = array<i64: 1, 32>}, {pipeline_mode = #tpu.pipeline_mode<synchronous>, transform_indices = @transform_6, window_bounds = array<i64: 1, 32>}, {pipeline_mode = #tpu.pipeline_mode<synchronous>, transform_indices = @transform_7, window_bounds = array<i64: 1, 32>}, {pipeline_mode = #tpu.pipeline_mode<synchronous>, transform_indices = @transform_8, window_bounds = array<i64: 32, 64>}, {pipeline_mode = #tpu.pipeline_mode<synchronous>, transform_indices = @transform_9, window_bounds = array<i64: 1, 64>}, {pipeline_mode = #tpu.pipeline_mode<synchronous>, transform_indices = @transform_10, window_bounds = array<i64: 64, 32>}, {pipeline_mode = #tpu.pipeline_mode<synchronous>, transform_indices = @transform_11, window_bounds = array<i64: 1, 32>}, {transform_indices = @transform_12, window_bounds = array<i64: 1, 8, 32>}]} {
    %c0 = arith.constant 0 : index
    %c0_0 = arith.constant 0 : index
    %c0_1 = arith.constant 0 : index
    %0 = vector.load %arg1[%c0, %c0_0, %c0_1] : memref<1x8x32xf32, #tpu.memory_space<vmem>>, vector<1x8x32xf32>
    %1 = vector.shape_cast %0 : vector<1x8x32xf32> to vector<8x32xf32>
    %cst = arith.constant dense<0.000000e+00> : vector<8xf32>
    %2 = vector.multi_reduction <add>, %1, %cst [1] : vector<8x32xf32> to vector<8xf32>
    %3 = vector.shape_cast %2 : vector<8xf32> to vector<8x1xf32>
    %cst_2 = arith.constant 3.200000e+01 : f32
    %4 = vector.broadcast %cst_2 : f32 to vector<8x1xf32>
    %5 = arith.divf %3, %4 : vector<8x1xf32>
    %6 = vector.broadcast %5 : vector<8x1xf32> to vector<8x32xf32>
    %7 = arith.subf %1, %6 : vector<8x32xf32>
    %8 = arith.mulf %7, %7 : vector<8x32xf32>
    %cst_3 = arith.constant dense<0.000000e+00> : vector<8xf32>
    %9 = vector.multi_reduction <add>, %8, %cst_3 [1] : vector<8x32xf32> to vector<8xf32>
    %10 = vector.shape_cast %9 : vector<8xf32> to vector<8x1xf32>
    %cst_4 = arith.constant 3.200000e+01 : f32
    %11 = vector.broadcast %cst_4 : f32 to vector<8x1xf32>
    %12 = arith.divf %10, %11 : vector<8x1xf32>
    %cst_5 = arith.constant 9.99999974E-6 : f32
    %13 = vector.broadcast %cst_5 : f32 to vector<8x1xf32>
    %14 = arith.addf %12, %13 : vector<8x1xf32>
    %15 = math.rsqrt %14 : vector<8x1xf32>
    %16 = vector.broadcast %15 : vector<8x1xf32> to vector<8x32xf32>
    %17 = arith.mulf %7, %16 : vector<8x32xf32>
    %c0_6 = arith.constant 0 : index
    %c0_7 = arith.constant 0 : index
    %18 = vector.load %arg2[%c0_6, %c0_7] : memref<1x32xf32, #tpu.memory_space<vmem>>, vector<1x32xf32>
    %19 = vector.broadcast %18 : vector<1x32xf32> to vector<8x32xf32>
    %20 = arith.mulf %17, %19 : vector<8x32xf32>
    %c0_8 = arith.constant 0 : index
    %c0_9 = arith.constant 0 : index
    %21 = vector.load %arg3[%c0_8, %c0_9] : memref<1x32xf32, #tpu.memory_space<vmem>>, vector<1x32xf32>
    %22 = vector.broadcast %21 : vector<1x32xf32> to vector<8x32xf32>
    %23 = arith.addf %20, %22 : vector<8x32xf32>
    %c0_10 = arith.constant 0 : index
    %c0_11 = arith.constant 0 : index
    %24 = vector.load %arg4[%c0_10, %c0_11] : memref<32x96xf32, #tpu.memory_space<vmem>>, vector<32x96xf32>
    %cst_12 = arith.constant dense<0.000000e+00> : vector<8x96xf32>
    %25 = tpu.matmul %23, %24, %cst_12 {dimension_numbers = #tpu.dot_dimension_numbers<[1], [0], [0], [1], [0, 0, 1, 1], [], []>} : vector<8x32xf32>, vector<32x96xf32>, vector<8x96xf32> -> vector<8x96xf32>
    %26 = vector.extract_strided_slice %25 {offsets = [0, 0], sizes = [8, 8], strides = [1, 1]} : vector<8x96xf32> to vector<8x8xf32>
    %27 = vector.shape_cast %26 : vector<8x8xf32> to vector<1x8x8xf32>
    %28 = vector.extract_strided_slice %25 {offsets = [0, 8], sizes = [8, 8], strides = [1, 1]} : vector<8x96xf32> to vector<8x8xf32>
    %29 = vector.shape_cast %28 : vector<8x8xf32> to vector<1x8x8xf32>
    %30 = vector.extract_strided_slice %25 {offsets = [0, 16], sizes = [8, 8], strides = [1, 1]} : vector<8x96xf32> to vector<8x8xf32>
    %31 = vector.shape_cast %30 : vector<8x8xf32> to vector<1x8x8xf32>
    %32 = vector.extract_strided_slice %25 {offsets = [0, 24], sizes = [8, 8], strides = [1, 1]} : vector<8x96xf32> to vector<8x8xf32>
    %33 = vector.shape_cast %32 : vector<8x8xf32> to vector<1x8x8xf32>
    %34 = tpu.concatenate %27, %29, %31, %33 in 0 : vector<1x8x8xf32>, vector<1x8x8xf32>, vector<1x8x8xf32>, vector<1x8x8xf32> -> vector<4x8x8xf32>
    %35 = vector.extract_strided_slice %25 {offsets = [0, 32], sizes = [8, 8], strides = [1, 1]} : vector<8x96xf32> to vector<8x8xf32>
    %36 = vector.shape_cast %35 : vector<8x8xf32> to vector<1x8x8xf32>
    %37 = vector.extract_strided_slice %25 {offsets = [0, 40], sizes = [8, 8], strides = [1, 1]} : vector<8x96xf32> to vector<8x8xf32>
    %38 = vector.shape_cast %37 : vector<8x8xf32> to vector<1x8x8xf32>
    %39 = vector.extract_strided_slice %25 {offsets = [0, 48], sizes = [8, 8], strides = [1, 1]} : vector<8x96xf32> to vector<8x8xf32>
    %40 = vector.shape_cast %39 : vector<8x8xf32> to vector<1x8x8xf32>
    %41 = vector.extract_strided_slice %25 {offsets = [0, 56], sizes = [8, 8], strides = [1, 1]} : vector<8x96xf32> to vector<8x8xf32>
    %42 = vector.shape_cast %41 : vector<8x8xf32> to vector<1x8x8xf32>
    %43 = tpu.concatenate %36, %38, %40, %42 in 0 : vector<1x8x8xf32>, vector<1x8x8xf32>, vector<1x8x8xf32>, vector<1x8x8xf32> -> vector<4x8x8xf32>
    %44 = vector.extract_strided_slice %25 {offsets = [0, 64], sizes = [8, 8], strides = [1, 1]} : vector<8x96xf32> to vector<8x8xf32>
    %45 = vector.shape_cast %44 : vector<8x8xf32> to vector<1x8x8xf32>
    %46 = vector.extract_strided_slice %25 {offsets = [0, 72], sizes = [8, 8], strides = [1, 1]} : vector<8x96xf32> to vector<8x8xf32>
    %47 = vector.shape_cast %46 : vector<8x8xf32> to vector<1x8x8xf32>
    %48 = vector.extract_strided_slice %25 {offsets = [0, 80], sizes = [8, 8], strides = [1, 1]} : vector<8x96xf32> to vector<8x8xf32>
    %49 = vector.shape_cast %48 : vector<8x8xf32> to vector<1x8x8xf32>
    %50 = vector.extract_strided_slice %25 {offsets = [0, 88], sizes = [8, 8], strides = [1, 1]} : vector<8x96xf32> to vector<8x8xf32>
    %51 = vector.shape_cast %50 : vector<8x8xf32> to vector<1x8x8xf32>
    %52 = tpu.concatenate %45, %47, %49, %51 in 0 : vector<1x8x8xf32>, vector<1x8x8xf32>, vector<1x8x8xf32>, vector<1x8x8xf32> -> vector<4x8x8xf32>
    "tpu.trace_start"() <{level = 10 : i32, message = "gnd,gmd->gnm"}> : () -> ()
    %cst_13 = arith.constant dense<0.000000e+00> : vector<4x8x8xf32>
    %53 = tpu.matmul %34, %43, %cst_13 {dimension_numbers = #tpu.dot_dimension_numbers<[2], [2], [1], [1], [0, 0, 0, 1, 1, 1], [0], [0]>} : vector<4x8x8xf32>, vector<4x8x8xf32>, vector<4x8x8xf32> -> vector<4x8x8xf32>
    "tpu.trace_stop"() : () -> ()
    %cst_14 = arith.constant dense<0xFF800000> : vector<4x8xf32>
    %54 = vector.multi_reduction <maximumf>, %53, %cst_14 [2] : vector<4x8x8xf32> to vector<4x8xf32>
    %55 = vector.shape_cast %54 : vector<4x8xf32> to vector<4x8x1xf32>
    %56 = vector.broadcast %55 : vector<4x8x1xf32> to vector<4x8x8xf32>
    %57 = arith.subf %53, %56 : vector<4x8x8xf32>
    %58 = math.exp %57 : vector<4x8x8xf32>
    %cst_15 = arith.constant dense<0.000000e+00> : vector<4x8xf32>
    %59 = vector.multi_reduction <add>, %58, %cst_15 [2] : vector<4x8x8xf32> to vector<4x8xf32>
    %60 = vector.shape_cast %59 : vector<4x8xf32> to vector<4x8x1xf32>
    %61 = tpu.reciprocal %60 {approx = true} : vector<4x8x1xf32> -> vector<4x8x1xf32>
    %62 = vector.broadcast %61 : vector<4x8x1xf32> to vector<4x8x8xf32>
    %63 = arith.mulf %58, %62 : vector<4x8x8xf32>
    "tpu.trace_start"() <{level = 10 : i32, message = "gnm,gmd->gnd"}> : () -> ()
    %cst_16 = arith.constant dense<0.000000e+00> : vector<4x8x8xf32>
    %64 = tpu.matmul %63, %52, %cst_16 {dimension_numbers = #tpu.dot_dimension_numbers<[2], [1], [1], [2], [0, 0, 0, 1, 1, 2], [0], [0]>} : vector<4x8x8xf32>, vector<4x8x8xf32>, vector<4x8x8xf32> -> vector<4x8x8xf32>
    "tpu.trace_stop"() : () -> ()
    %65 = vector.extract_strided_slice %64 {offsets = [0, 0, 0], sizes = [1, 8, 8], strides = [1, 1, 1]} : vector<4x8x8xf32> to vector<1x8x8xf32>
    %66 = vector.shape_cast %65 : vector<1x8x8xf32> to vector<8x8xf32>
    %67 = vector.extract_strided_slice %64 {offsets = [1, 0, 0], sizes = [1, 8, 8], strides = [1, 1, 1]} : vector<4x8x8xf32> to vector<1x8x8xf32>
    %68 = vector.shape_cast %67 : vector<1x8x8xf32> to vector<8x8xf32>
    %69 = vector.extract_strided_slice %64 {offsets = [2, 0, 0], sizes = [1, 8, 8], strides = [1, 1, 1]} : vector<4x8x8xf32> to vector<1x8x8xf32>
    %70 = vector.shape_cast %69 : vector<1x8x8xf32> to vector<8x8xf32>
    %71 = vector.extract_strided_slice %64 {offsets = [3, 0, 0], sizes = [1, 8, 8], strides = [1, 1, 1]} : vector<4x8x8xf32> to vector<1x8x8xf32>
    %72 = vector.shape_cast %71 : vector<1x8x8xf32> to vector<8x8xf32>
    %73 = tpu.concatenate %66, %68, %70, %72 in 1 : vector<8x8xf32>, vector<8x8xf32>, vector<8x8xf32>, vector<8x8xf32> -> vector<8x32xf32>
    %c0_17 = arith.constant 0 : index
    %c0_18 = arith.constant 0 : index
    %74 = vector.load %arg5[%c0_17, %c0_18] : memref<32x32xf32, #tpu.memory_space<vmem>>, vector<32x32xf32>
    %cst_19 = arith.constant dense<0.000000e+00> : vector<8x32xf32>
    %75 = tpu.matmul %73, %74, %cst_19 {dimension_numbers = #tpu.dot_dimension_numbers<[1], [0], [0], [1], [0, 0, 1, 1], [], []>} : vector<8x32xf32>, vector<32x32xf32>, vector<8x32xf32> -> vector<8x32xf32>
    %76 = arith.addf %1, %75 : vector<8x32xf32>
    %c0_20 = arith.constant 0 : index
    %c0_21 = arith.constant 0 : index
    %77 = vector.load %arg6[%c0_20, %c0_21] : memref<1x32xf32, #tpu.memory_space<vmem>>, vector<1x32xf32>
    %78 = vector.broadcast %77 : vector<1x32xf32> to vector<8x32xf32>
    %79 = arith.addf %76, %78 : vector<8x32xf32>
    %cst_22 = arith.constant dense<0.000000e+00> : vector<8xf32>
    %80 = vector.multi_reduction <add>, %79, %cst_22 [1] : vector<8x32xf32> to vector<8xf32>
    %81 = vector.shape_cast %80 : vector<8xf32> to vector<8x1xf32>
    %cst_23 = arith.constant 3.200000e+01 : f32
    %82 = vector.broadcast %cst_23 : f32 to vector<8x1xf32>
    %83 = arith.divf %81, %82 : vector<8x1xf32>
    %84 = vector.broadcast %83 : vector<8x1xf32> to vector<8x32xf32>
    %85 = arith.subf %79, %84 : vector<8x32xf32>
    %86 = arith.mulf %85, %85 : vector<8x32xf32>
    %cst_24 = arith.constant dense<0.000000e+00> : vector<8xf32>
    %87 = vector.multi_reduction <add>, %86, %cst_24 [1] : vector<8x32xf32> to vector<8xf32>
    %88 = vector.shape_cast %87 : vector<8xf32> to vector<8x1xf32>
    %cst_25 = arith.constant 3.200000e+01 : f32
    %89 = vector.broadcast %cst_25 : f32 to vector<8x1xf32>
    %90 = arith.divf %88, %89 : vector<8x1xf32>
    %cst_26 = arith.constant 9.99999974E-6 : f32
    %91 = vector.broadcast %cst_26 : f32 to vector<8x1xf32>
    %92 = arith.addf %90, %91 : vector<8x1xf32>
    %93 = math.rsqrt %92 : vector<8x1xf32>
    %94 = vector.broadcast %93 : vector<8x1xf32> to vector<8x32xf32>
    %95 = arith.mulf %85, %94 : vector<8x32xf32>
    %c0_27 = arith.constant 0 : index
    %c0_28 = arith.constant 0 : index
    %96 = vector.load %arg7[%c0_27, %c0_28] : memref<1x32xf32, #tpu.memory_space<vmem>>, vector<1x32xf32>
    %97 = vector.broadcast %96 : vector<1x32xf32> to vector<8x32xf32>
    %98 = arith.mulf %95, %97 : vector<8x32xf32>
    %c0_29 = arith.constant 0 : index
    %c0_30 = arith.constant 0 : index
    %99 = vector.load %arg8[%c0_29, %c0_30] : memref<1x32xf32, #tpu.memory_space<vmem>>, vector<1x32xf32>
    %100 = vector.broadcast %99 : vector<1x32xf32> to vector<8x32xf32>
    %101 = arith.addf %98, %100 : vector<8x32xf32>
    %c0_31 = arith.constant 0 : index
    %c0_32 = arith.constant 0 : index
    %102 = vector.load %arg9[%c0_31, %c0_32] : memref<32x64xf32, #tpu.memory_space<vmem>>, vector<32x64xf32>
    %cst_33 = arith.constant dense<0.000000e+00> : vector<8x64xf32>
    %103 = tpu.matmul %101, %102, %cst_33 {dimension_numbers = #tpu.dot_dimension_numbers<[1], [0], [0], [1], [0, 0, 1, 1], [], []>} : vector<8x32xf32>, vector<32x64xf32>, vector<8x64xf32> -> vector<8x64xf32>
    %c0_34 = arith.constant 0 : index
    %c0_35 = arith.constant 0 : index
    %104 = vector.load %arg10[%c0_34, %c0_35] : memref<1x64xf32, #tpu.memory_space<vmem>>, vector<1x64xf32>
    %105 = vector.broadcast %104 : vector<1x64xf32> to vector<8x64xf32>
    %106 = arith.addf %103, %105 : vector<8x64xf32>
    %cst_36 = arith.constant 5.000000e-01 : f32
    %107 = vector.broadcast %cst_36 : f32 to vector<8x64xf32>
    %108 = arith.mulf %107, %106 : vector<8x64xf32>
    %cst_37 = arith.constant 4.471500e-02 : f32
    %109 = vector.broadcast %cst_37 : f32 to vector<8x64xf32>
    %110 = arith.mulf %109, %106 : vector<8x64xf32>
    %111 = arith.mulf %110, %106 : vector<8x64xf32>
    %112 = arith.mulf %111, %106 : vector<8x64xf32>
    %113 = arith.addf %106, %112 : vector<8x64xf32>
    %cst_38 = arith.constant 0.797884583 : f32
    %114 = vector.broadcast %cst_38 : f32 to vector<8x64xf32>
    %115 = arith.mulf %114, %113 : vector<8x64xf32>
    %116 = math.tanh %115 : vector<8x64xf32>
    %cst_39 = arith.constant 1.000000e+00 : f32
    %117 = vector.broadcast %cst_39 : f32 to vector<8x64xf32>
    %118 = arith.addf %117, %116 : vector<8x64xf32>
    %119 = arith.mulf %108, %118 : vector<8x64xf32>
    %c0_40 = arith.constant 0 : index
    %c0_41 = arith.constant 0 : index
    %120 = vector.load %arg11[%c0_40, %c0_41] : memref<64x32xf32, #tpu.memory_space<vmem>>, vector<64x32xf32>
    %cst_42 = arith.constant dense<0.000000e+00> : vector<8x32xf32>
    %121 = tpu.matmul %119, %120, %cst_42 {dimension_numbers = #tpu.dot_dimension_numbers<[1], [0], [0], [1], [0, 0, 1, 1], [], []>} : vector<8x64xf32>, vector<64x32xf32>, vector<8x32xf32> -> vector<8x32xf32>
    %c0_43 = arith.constant 0 : index
    %c0_44 = arith.constant 0 : index
    %122 = vector.load %arg12[%c0_43, %c0_44] : memref<1x32xf32, #tpu.memory_space<vmem>>, vector<1x32xf32>
    %123 = vector.broadcast %122 : vector<1x32xf32> to vector<8x32xf32>
    %124 = arith.addf %121, %123 : vector<8x32xf32>
    %125 = arith.addf %79, %124 : vector<8x32xf32>
    %126 = vector.shape_cast %125 : vector<8x32xf32> to vector<1x8x32xf32>
    %c0_45 = arith.constant 0 : index
    %c0_46 = arith.constant 0 : index
    %c0_47 = arith.constant 0 : index
    %127 = vector.load %arg13[%c0_45, %c0_46, %c0_47] : memref<1x8x32xf32, #tpu.memory_space<vmem>>, vector<1x8x32xf32>
    tpu.vector_store %arg13[%c0_45, %c0_46, %c0_47], %126 {strides = array<i32>} : memref<1x8x32xf32, #tpu.memory_space<vmem>>, vector<1x8x32xf32>,
    return
  }
  func.func @transform_0(%arg0: i32) -> (i32, i32, i32) {
    %c0_i32 = arith.constant 0 : i32
    %c0_i32_0 = arith.constant 0 : i32
    %c0_i32_1 = arith.constant 0 : i32
    return %arg0, %c0_i32, %c0_i32_0 : i32, i32, i32
  }
  func.func @transform_1(%arg0: i32) -> (i32, i32) {
    %c0_i32 = arith.constant 0 : i32
    %c0_i32_0 = arith.constant 0 : i32
    %c0_i32_1 = arith.constant 0 : i32
    return %c0_i32, %c0_i32_0 : i32, i32
  }
  func.func @transform_2(%arg0: i32) -> (i32, i32) {
    %c0_i32 = arith.constant 0 : i32
    %c0_i32_0 = arith.constant 0 : i32
    %c0_i32_1 = arith.constant 0 : i32
    return %c0_i32, %c0_i32_0 : i32, i32
  }
  func.func @transform_3(%arg0: i32) -> (i32, i32) {
    %c0_i32 = arith.constant 0 : i32
    %c0_i32_0 = arith.constant 0 : i32
    %c0_i32_1 = arith.constant 0 : i32
    return %c0_i32, %c0_i32_0 : i32, i32
  }
  func.func @transform_4(%arg0: i32) -> (i32, i32) {
    %c0_i32 = arith.constant 0 : i32
    %c0_i32_0 = arith.constant 0 : i32
    %c0_i32_1 = arith.constant 0 : i32
    return %c0_i32, %c0_i32_0 : i32, i32
  }
  func.func @transform_5(%arg0: i32) -> (i32, i32) {
    %c0_i32 = arith.constant 0 : i32
    %c0_i32_0 = arith.constant 0 : i32
    %c0_i32_1 = arith.constant 0 : i32
    return %c0_i32, %c0_i32_0 : i32, i32
  }
  func.func @transform_6(%arg0: i32) -> (i32, i32) {
    %c0_i32 = arith.constant 0 : i32
    %c0_i32_0 = arith.constant 0 : i32
    %c0_i32_1 = arith.constant 0 : i32
    return %c0_i32, %c0_i32_0 : i32, i32
  }
  func.func @transform_7(%arg0: i32) -> (i32, i32) {
    %c0_i32 = arith.constant 0 : i32
    %c0_i32_0 = arith.constant 0 : i32
    %c0_i32_1 = arith.constant 0 : i32
    return %c0_i32, %c0_i32_0 : i32, i32
  }
  func.func @transform_8(%arg0: i32) -> (i32, i32) {
    %c0_i32 = arith.constant 0 : i32
    %c0_i32_0 = arith.constant 0 : i32
    %c0_i32_1 = arith.constant 0 : i32
    return %c0_i32, %c0_i32_0 : i32, i32
  }
  func.func @transform_9(%arg0: i32) -> (i32, i32) {
    %c0_i32 = arith.constant 0 : i32
    %c0_i32_0 = arith.constant 0 : i32
    %c0_i32_1 = arith.constant 0 : i32
    return %c0_i32, %c0_i32_0 : i32, i32
  }
  func.func @transform_10(%arg0: i32) -> (i32, i32) {
    %c0_i32 = arith.constant 0 : i32
    %c0_i32_0 = arith.constant 0 : i32
    %c0_i32_1 = arith.constant 0 : i32
    return %c0_i32, %c0_i32_0 : i32, i32
  }
  func.func @transform_11(%arg0: i32) -> (i32, i32) {
    %c0_i32 = arith.constant 0 : i32
    %c0_i32_0 = arith.constant 0 : i32
    %c0_i32_1 = arith.constant 0 : i32
    return %c0_i32, %c0_i32_0 : i32, i32
  }
  func.func @transform_12(%arg0: i32) -> (i32, i32, i32) {
    %c0_i32 = arith.constant 0 : i32
    %c0_i32_0 = arith.constant 0 : i32
    %c0_i32_1 = arith.constant 0 : i32
    return %arg0, %c0_i32, %c0_i32_0 : i32, i32, i32
  }
}

</mosaic_0001>

<llo_original>
// kernel: tpu_custom_call.1
$region0: #{tpu_custom_call.1}
  #allocation0 [shape = 'u32[]', space=smem, size = 0x4, offset = 0x4, fixed_abs, tag = 'smem constant byte address 0x4 - core index']
  #allocation1 [shape = 'u32[144,128]{1,0:T(1,128)}', space=vmem, size = 0x12000, scoped, tag = 'internal scratch']
  %s0 = inlined_call_operand.hbm [shape: f32[2,8,32], index: 0, kind: input, shape index: {}]
  %s1 = inlined_call_operand.vmem [shape: f32[1,32], index: 1, kind: input, shape index: {}]
  %s2 = inlined_call_operand.vmem [shape: f32[1,32], index: 2, kind: input, shape index: {}]
  %s3 = inlined_call_operand.vmem [shape: f32[32,96], index: 3, kind: input, shape index: {}]
  %s4 = inlined_call_operand.vmem [shape: f32[32,32], index: 4, kind: input, shape index: {}]
  %s5 = inlined_call_operand.vmem [shape: f32[1,32], index: 5, kind: input, shape index: {}]
  %s6 = inlined_call_operand.vmem [shape: f32[1,32], index: 6, kind: input, shape index: {}]
  %s7 = inlined_call_operand.vmem [shape: f32[1,32], index: 7, kind: input, shape index: {}]
  %s8 = inlined_call_operand.vmem [shape: f32[32,64], index: 8, kind: input, shape index: {}]
  %s9 = inlined_call_operand.hbm [shape: f32[1,64], index: 9, kind: input, shape index: {}]
  %s10 = inlined_call_operand.vmem [shape: f32[64,32], index: 10, kind: input, shape index: {}]
  %s11 = inlined_call_operand.vmem [shape: f32[1,32], index: 11, kind: input, shape index: {}]
  %s12 = inlined_call_operand.hbm [shape: f32[2,8,32], index: 12, kind: output, shape index: {}]
  %s13 = sld [smem:[#allocation0]]
  $region89: #{tpu_custom_call.1} parent=0
    _
  %s15 = ssub.s32 1, %s13
  %s16 = scalar_select 0, %s15, %s13
  $region1: #{tpu_custom_call.1} parent=0
    #allocation2 [shape = 'u8[8192]{0}', space=vmem, size = 0x2000, scoped, tag = 'input window, operand 0']
    #allocation3 [shape = 's32[2]{0}', space=sflag, size = 0x8, scoped, tag = 'scoped memory for tpu_custom_call.1']
    #allocation4 [shape = 's32[2]{0}', space=sflag, size = 0x8, scoped, tag = 'scoped memory for tpu_custom_call.1']
    #allocation5 [shape = 'u8[512]{0}', space=vmem, size = 0x400, scoped, tag = 'input window, operand 9, single buffered']
    #allocation6 [shape = 's32[1]{0}', space=sflag, size = 0x4, scoped, tag = 'scoped memory for tpu_custom_call.1']
    #allocation7 [shape = 'u8[8192]{0}', space=vmem, size = 0x2000, scoped, tag = 'output window, operand 0']
    %17 = vsyncpa [#allocation3], 0
    %s18 = scalar_lea.sflag [#allocation3], 1
    %19 = vsyncpa %s18, 0
    %20 = vsyncpa [#allocation6], 0
    %21 = vsyncpa [#allocation4], 0
    %s22 = scalar_lea.sflag [#allocation4], 1
    %23 = vsyncpa %s22, 0
    loop: start=0, step=1, limit=4
    $region2: #{tpu_custom_call.1} parent=1 // loop_pre_header
      _
    $region3: #{tpu_custom_call.1} parent=1 // loop_header
      %s25 = sphi 0, %s29
      %p26 = scmp.ge.s32.totalorder %s25, 4
      %s35 = sphi 0, %s37
      %s38 = sphi 0, %s35
      %s39 = sphi 0, %s38
      %s55 = sphi 0, %s39
      %s59 = sphi 0, %s59
      %s61 = sphi 0, %s59
      %s62 = sphi 0, %s61
      %s76 = sphi 0, %s62
      %s80 = sphi 0, %s80
      %s82 = sphi 0, %s80
      %s83 = sphi 0, %s82
      %s97 = sphi 0, %s83
      %s101 = sphi 0, %s101
      %s103 = sphi 0, %s101
      %s104 = sphi 0, %s103
      %s118 = sphi 0, %s104
      %s122 = sphi 0, %s122
      %s124 = sphi 0, %s122
      %s125 = sphi 0, %s124
      %s139 = sphi 0, %s125
      %s143 = sphi 0, %s143
      %s145 = sphi 0, %s143
      %s146 = sphi 0, %s145
      %s160 = sphi 0, %s146
      %s164 = sphi 0, %s164
      %s166 = sphi 0, %s164
      %s167 = sphi 0, %s166
      %s181 = sphi 0, %s167
      %s185 = sphi 0, %s185
      %s187 = sphi 0, %s185
      %s188 = sphi 0, %s187
      %s202 = sphi 0, %s188
      %s206 = sphi 0, %s206
      %s208 = sphi 0, %s206
      %s209 = sphi 0, %s208
      %s223 = sphi 0, %s209
      %s227 = sphi 0, %s227
      %s229 = sphi 0, %s227
      %s230 = sphi 0, %s229
      %s244 = sphi 0, %s230
      %s248 = sphi 0, %s248
      %s250 = sphi 0, %s248
      %s251 = sphi 0, %s250
      %s265 = sphi 0, %s251
      %s269 = sphi 0, %s269
      %s271 = sphi 0, %s269
      %s272 = sphi 0, %s271
      %s286 = sphi 0, %s272
      %s292 = sphi 0, %s294
      %s295 = sphi 0, %s292
      %s296 = sphi 0, %s295
      %s312 = sphi 0, %s296
    $region4: #{tpu_custom_call.1} parent=1 // loop_header_branch
      %28 = sbr.rel (%p26) target = $region8
    $region5: #{tpu_custom_call.1} parent=1 // loop_body
      %s30 = ssub.s32 %s25, 1
      %s31 = ssub.s32 %s25, 2
      %s32 = sadd.s32 %s25, 1
      %s33 = ssub.s32 %s25, %s32
      %p34 = scmp.eq.s32.totalorder %s33, 0
      %s36 = sadd.s32 %s35, 1
      %s37 = scalar_select %p34, %s35, %s36
      %p40 = pneg %p34
      %p41 = scmp.eq.s32.totalorder %s25, 1
      %p42 = por %p40, %p41
      %p43 = scmp.ne.s32.totalorder %s35, %s38
      %p44 = scmp.eq.s32.totalorder %s25, 0
      %p45 = por %p43, %p44
      %p46 = scmp.ne.s32.totalorder %s35, %s38
      %p47 = scmp.eq.s32.totalorder %s30, 1
      %p48 = por %p46, %p47
      %p49 = scmp.ne.s32.totalorder %s38, %s39
      %p50 = scmp.eq.s32.totalorder %s30, 0
      %p51 = por %p49, %p50
      %p52 = scmp.ne.s32.totalorder %s38, %s39
      %p53 = scmp.eq.s32.totalorder %s31, 1
      %p54 = por %p52, %p53
      %p56 = scmp.ne.s32.totalorder %s39, %s55
      %p57 = scmp.eq.s32.totalorder %s31, 0
      %p58 = por %p56, %p57
      %s60 = sadd.s32 %s59, 1
      %p63 = scmp.eq.s32.totalorder %s25, 1
      %p64 = scmp.ne.s32.totalorder %s59, %s61
      %p65 = scmp.eq.s32.totalorder %s25, 0
      %p66 = por %p64, %p65
      %p67 = scmp.ne.s32.totalorder %s59, %s61
      %p68 = scmp.eq.s32.totalorder %s30, 1
      %p69 = por %p67, %p68
      %p70 = scmp.ne.s32.totalorder %s61, %s62
      %p71 = scmp.eq.s32.totalorder %s30, 0
      %p72 = por %p70, %p71
      %p73 = scmp.ne.s32.totalorder %s61, %s62
      %p74 = scmp.eq.s32.totalorder %s31, 1
      %p75 = por %p73, %p74
      %p77 = scmp.ne.s32.totalorder %s62, %s76
      %p78 = scmp.eq.s32.totalorder %s31, 0
      %p79 = por %p77, %p78
      %s81 = sadd.s32 %s80, 1
      %p84 = scmp.eq.s32.totalorder %s25, 1
      %p85 = scmp.ne.s32.totalorder %s80, %s82
      %p86 = scmp.eq.s32.totalorder %s25, 0
      %p87 = por %p85, %p86
      %p88 = scmp.ne.s32.totalorder %s80, %s82
      %p89 = scmp.eq.s32.totalorder %s30, 1
      %p90 = por %p88, %p89
      %p91 = scmp.ne.s32.totalorder %s82, %s83
      %p92 = scmp.eq.s32.totalorder %s30, 0
      %p93 = por %p91, %p92
      %p94 = scmp.ne.s32.totalorder %s82, %s83
      %p95 = scmp.eq.s32.totalorder %s31, 1
      %p96 = por %p94, %p95
      %p98 = scmp.ne.s32.totalorder %s83, %s97
      %p99 = scmp.eq.s32.totalorder %s31, 0
      %p100 = por %p98, %p99
      %s102 = sadd.s32 %s101, 1
      %p105 = scmp.eq.s32.totalorder %s25, 1
      %p106 = scmp.ne.s32.totalorder %s101, %s103
      %p107 = scmp.eq.s32.totalorder %s25, 0
      %p108 = por %p106, %p107
      %p109 = scmp.ne.s32.totalorder %s101, %s103
      %p110 = scmp.eq.s32.totalorder %s30, 1
      %p111 = por %p109, %p110
      %p112 = scmp.ne.s32.totalorder %s103, %s104
      %p113 = scmp.eq.s32.totalorder %s30, 0
      %p114 = por %p112, %p113
      %p115 = scmp.ne.s32.totalorder %s103, %s104
      %p116 = scmp.eq.s32.totalorder %s31, 1
      %p117 = por %p115, %p116
      %p119 = scmp.ne.s32.totalorder %s104, %s118
      %p120 = scmp.eq.s32.totalorder %s31, 0
      %p121 = por %p119, %p120
      %s123 = sadd.s32 %s122, 1
      %p126 = scmp.eq.s32.totalorder %s25, 1
      %p127 = scmp.ne.s32.totalorder %s122, %s124
      %p128 = scmp.eq.s32.totalorder %s25, 0
      %p129 = por %p127, %p128
      %p130 = scmp.ne.s32.totalorder %s122, %s124
      %p131 = scmp.eq.s32.totalorder %s30, 1
      %p132 = por %p130, %p131
      %p133 = scmp.ne.s32.totalorder %s124, %s125
      %p134 = scmp.eq.s32.totalorder %s30, 0
      %p135 = por %p133, %p134
      %p136 = scmp.ne.s32.totalorder %s124, %s125
      %p137 = scmp.eq.s32.totalorder %s31, 1
      %p138 = por %p136, %p137
      %p140 = scmp.ne.s32.totalorder %s125, %s139
      %p141 = scmp.eq.s32.totalorder %s31, 0
      %p142 = por %p140, %p141
      %s144 = sadd.s32 %s143, 1
      %p147 = scmp.eq.s32.totalorder %s25, 1
      %p148 = scmp.ne.s32.totalorder %s143, %s145
      %p149 = scmp.eq.s32.totalorder %s25, 0
      %p150 = por %p148, %p149
      %p151 = scmp.ne.s32.totalorder %s143, %s145
      %p152 = scmp.eq.s32.totalorder %s30, 1
      %p153 = por %p151, %p152
      %p154 = scmp.ne.s32.totalorder %s145, %s146
      %p155 = scmp.eq.s32.totalorder %s30, 0
      %p156 = por %p154, %p155
      %p157 = scmp.ne.s32.totalorder %s145, %s146
      %p158 = scmp.eq.s32.totalorder %s31, 1
      %p159 = por %p157, %p158
      %p161 = scmp.ne.s32.totalorder %s146, %s160
      %p162 = scmp.eq.s32.totalorder %s31, 0
      %p163 = por %p161, %p162
      %s165 = sadd.s32 %s164, 1
      %p168 = scmp.eq.s32.totalorder %s25, 1
      %p169 = scmp.ne.s32.totalorder %s164, %s166
      %p170 = scmp.eq.s32.totalorder %s25, 0
      %p171 = por %p169, %p170
      %p172 = scmp.ne.s32.totalorder %s164, %s166
      %p173 = scmp.eq.s32.totalorder %s30, 1
      %p174 = por %p172, %p173
      %p175 = scmp.ne.s32.totalorder %s166, %s167
      %p176 = scmp.eq.s32.totalorder %s30, 0
      %p177 = por %p175, %p176
      %p178 = scmp.ne.s32.totalorder %s166, %s167
      %p179 = scmp.eq.s32.totalorder %s31, 1
      %p180 = por %p178, %p179
      %p182 = scmp.ne.s32.totalorder %s167, %s181
      %p183 = scmp.eq.s32.totalorder %s31, 0
      %p184 = por %p182, %p183
      %s186 = sadd.s32 %s185, 1
      %p189 = scmp.eq.s32.totalorder %s25, 1
      %p190 = scmp.ne.s32.totalorder %s185, %s187
      %p191 = scmp.eq.s32.totalorder %s25, 0
      %p192 = por %p190, %p191
      %p193 = scmp.ne.s32.totalorder %s185, %s187
      %p194 = scmp.eq.s32.totalorder %s30, 1
      %p195 = por %p193, %p194
      %p196 = scmp.ne.s32.totalorder %s187, %s188
      %p197 = scmp.eq.s32.totalorder %s30, 0
      %p198 = por %p196, %p197
      %p199 = scmp.ne.s32.totalorder %s187, %s188
      %p200 = scmp.eq.s32.totalorder %s31, 1
      %p201 = por %p199, %p200
      %p203 = scmp.ne.s32.totalorder %s188, %s202
      %p204 = scmp.eq.s32.totalorder %s31, 0
      %p205 = por %p203, %p204
      %s207 = sadd.s32 %s206, 1
      %p210 = scmp.eq.s32.totalorder %s25, 1
      %p211 = scmp.ne.s32.totalorder %s206, %s208
      %p212 = scmp.eq.s32.totalorder %s25, 0
      %p213 = por %p211, %p212
      %p214 = scmp.ne.s32.totalorder %s206, %s208
      %p215 = scmp.eq.s32.totalorder %s30, 1
      %p216 = por %p214, %p215
      %p217 = scmp.ne.s32.totalorder %s208, %s209
      %p218 = scmp.eq.s32.totalorder %s30, 0
      %p219 = por %p217, %p218
      %p220 = scmp.ne.s32.totalorder %s208, %s209
      %p221 = scmp.eq.s32.totalorder %s31, 1
      %p222 = por %p220, %p221
      %p224 = scmp.ne.s32.totalorder %s209, %s223
      %p225 = scmp.eq.s32.totalorder %s31, 0
      %p226 = por %p224, %p225
      %s228 = sadd.s32 %s227, 1
      %p231 = scmp.eq.s32.totalorder %s25, 1
      %p232 = scmp.ne.s32.totalorder %s227, %s229
      %p233 = scmp.eq.s32.totalorder %s25, 0
      %p234 = por %p232, %p233
      %p235 = scmp.ne.s32.totalorder %s227, %s229
      %p236 = scmp.eq.s32.totalorder %s30, 1
      %p237 = por %p235, %p236
      %p238 = scmp.ne.s32.totalorder %s229, %s230
      %p239 = scmp.eq.s32.totalorder %s30, 0
      %p240 = por %p238, %p239
      %p241 = scmp.ne.s32.totalorder %s229, %s230
      %p242 = scmp.eq.s32.totalorder %s31, 1
      %p243 = por %p241, %p242
      %p245 = scmp.ne.s32.totalorder %s230, %s244
      %p246 = scmp.eq.s32.totalorder %s31, 0
      %p247 = por %p245, %p246
      %s249 = sadd.s32 %s248, 1
      %p252 = scmp.eq.s32.totalorder %s25, 1
      %p253 = scmp.ne.s32.totalorder %s248, %s250
      %p254 = scmp.eq.s32.totalorder %s25, 0
      %p255 = por %p253, %p254
      %p256 = scmp.ne.s32.totalorder %s248, %s250
      %p257 = scmp.eq.s32.totalorder %s30, 1
      %p258 = por %p256, %p257
      %p259 = scmp.ne.s32.totalorder %s250, %s251
      %p260 = scmp.eq.s32.totalorder %s30, 0
      %p261 = por %p259, %p260
      %p262 = scmp.ne.s32.totalorder %s250, %s251
      %p263 = scmp.eq.s32.totalorder %s31, 1
      %p264 = por %p262, %p263
      %p266 = scmp.ne.s32.totalorder %s251, %s265
      %p267 = scmp.eq.s32.totalorder %s31, 0
      %p268 = por %p266, %p267
      %s270 = sadd.s32 %s269, 1
      %p273 = scmp.eq.s32.totalorder %s25, 1
      %p274 = scmp.ne.s32.totalorder %s269, %s271
      %p275 = scmp.eq.s32.totalorder %s25, 0
      %p276 = por %p274, %p275
      %p277 = scmp.ne.s32.totalorder %s269, %s271
      %p278 = scmp.eq.s32.totalorder %s30, 1
      %p279 = por %p277, %p278
      %p280 = scmp.ne.s32.totalorder %s271, %s272
      %p281 = scmp.eq.s32.totalorder %s30, 0
      %p282 = por %p280, %p281
      %p283 = scmp.ne.s32.totalorder %s271, %s272
      %p284 = scmp.eq.s32.totalorder %s31, 1
      %p285 = por %p283, %p284
      %p287 = scmp.ne.s32.totalorder %s272, %s286
      %p288 = scmp.eq.s32.totalorder %s31, 0
      %p289 = por %p287, %p288
      %s290 = ssub.s32 %s25, %s32
      %p291 = scmp.eq.s32.totalorder %s290, 0
      %s293 = sadd.s32 %s292, 1
      %s294 = scalar_select %p291, %s292, %s293
      %p297 = pneg %p291
      %p298 = scmp.eq.s32.totalorder %s25, 1
      %p299 = por %p297, %p298
      %p300 = scmp.ne.s32.totalorder %s292, %s295
      %p301 = scmp.eq.s32.totalorder %s25, 0
      %p302 = por %p300, %p301
      %p303 = scmp.ne.s32.totalorder %s292, %s295
      %p304 = scmp.eq.s32.totalorder %s30, 1
      %p305 = por %p303, %p304
      %p306 = scmp.ne.s32.totalorder %s295, %s296
      %p307 = scmp.eq.s32.totalorder %s30, 0
      %p308 = por %p306, %p307
      %p309 = scmp.ne.s32.totalorder %s295, %s296
      %p310 = scmp.eq.s32.totalorder %s31, 1
      %p311 = por %p309, %p310
      %p313 = scmp.ne.s32.totalorder %s296, %s312
      %p314 = scmp.eq.s32.totalorder %s31, 0
      %p315 = por %p313, %p314
      %p316 = scmp.le.s32.totalorder 1, %s25
      %p317 = scmp.lt.s32.totalorder %s25, 3
      %p318 = pnand %p316, %p317
      %p319 = pneg %p318
      // Predicated region
      $region9: #{tpu_custom_call.1} parent=5 // pred_check
        _
      $region10: #{tpu_custom_call.1} parent=5 // pred_check_branch
        %321 = sbr.rel (%p318) target = $region12
      $region11: #{tpu_custom_call.1} parent=5 // pred_region
        %s322 = ssub.s32 %s25, 1
        // Predicated region
        $region13: #{tpu_custom_call.1} parent=11 // pred_check
          %p323 = pneg %p72
        $region14: #{tpu_custom_call.1} parent=11 // pred_check_branch
          %325 = sbr.rel (%p323) target = $region16
        $region15: #{tpu_custom_call.1} parent=11 // pred_region
          _
        $region16: #{tpu_custom_call.1} parent=11 // pred_fallthru
          _
        // Predicated region
        $region17: #{tpu_custom_call.1} parent=11 // pred_check
          %p326 = pneg %p93
        $region18: #{tpu_custom_call.1} parent=11 // pred_check_branch
          %328 = sbr.rel (%p326) target = $region20
        $region19: #{tpu_custom_call.1} parent=11 // pred_region
          _
        $region20: #{tpu_custom_call.1} parent=11 // pred_fallthru
          _
        // Predicated region
        $region21: #{tpu_custom_call.1} parent=11 // pred_check
          %p329 = pneg %p114
        $region22: #{tpu_custom_call.1} parent=11 // pred_check_branch
          %331 = sbr.rel (%p329) target = $region24
        $region23: #{tpu_custom_call.1} parent=11 // pred_region
          _
        $region24: #{tpu_custom_call.1} parent=11 // pred_fallthru
          _
        // Predicated region
        $region25: #{tpu_custom_call.1} parent=11 // pred_check
          %p332 = pneg %p135
        $region26: #{tpu_custom_call.1} parent=11 // pred_check_branch
          %334 = sbr.rel (%p332) target = $region28
        $region27: #{tpu_custom_call.1} parent=11 // pred_region
          _
        $region28: #{tpu_custom_call.1} parent=11 // pred_fallthru
          _
        // Predicated region
        $region29: #{tpu_custom_call.1} parent=11 // pred_check
          %p335 = pneg %p156
        $region30: #{tpu_custom_call.1} parent=11 // pred_check_branch
          %337 = sbr.rel (%p335) target = $region32
        $region31: #{tpu_custom_call.1} parent=11 // pred_region
          _
        $region32: #{tpu_custom_call.1} parent=11 // pred_fallthru
          _
        // Predicated region
        $region33: #{tpu_custom_call.1} parent=11 // pred_check
          %p338 = pneg %p177
        $region34: #{tpu_custom_call.1} parent=11 // pred_check_branch
          %340 = sbr.rel (%p338) target = $region36
        $region35: #{tpu_custom_call.1} parent=11 // pred_region
          _
        $region36: #{tpu_custom_call.1} parent=11 // pred_fallthru
          _
        // Predicated region
        $region37: #{tpu_custom_call.1} parent=11 // pred_check
          %p341 = pneg %p198
        $region38: #{tpu_custom_call.1} parent=11 // pred_check_branch
          %343 = sbr.rel (%p341) target = $region40
        $region39: #{tpu_custom_call.1} parent=11 // pred_region
          _
        $region40: #{tpu_custom_call.1} parent=11 // pred_fallthru
          _
        // Predicated region
        $region41: #{tpu_custom_call.1} parent=11 // pred_check
          %p344 = pneg %p219
        $region42: #{tpu_custom_call.1} parent=11 // pred_check_branch
          %346 = sbr.rel (%p344) target = $region44
        $region43: #{tpu_custom_call.1} parent=11 // pred_region
          _
        $region44: #{tpu_custom_call.1} parent=11 // pred_fallthru
          _
        // Predicated region
        $region45: #{tpu_custom_call.1} parent=11 // pred_check
          %p347 = pneg %p240
        $region46: #{tpu_custom_call.1} parent=11 // pred_check_branch
          %349 = sbr.rel (%p347) target = $region48
        $region47: #{tpu_custom_call.1} parent=11 // pred_region
          %s351 = ssub.s32 16, 16
          %352 = vsyncadd [#allocation6], %s351
          %s354 = sshll.u32 [#allocation5], 4
          %s355 = int_to_ptr.vmem [resolvable:$true] %s354
          %357 = dma.hbm_to_vmem [thread:$0]  %s9, 16, %s355, [#allocation6]
        $region48: #{tpu_custom_call.1} parent=11 // pred_fallthru
          _
        // Predicated region
        $region49: #{tpu_custom_call.1} parent=11 // pred_check
          %p358 = pneg %p261
        $region50: #{tpu_custom_call.1} parent=11 // pred_check_branch
          %360 = sbr.rel (%p358) target = $region52
        $region51: #{tpu_custom_call.1} parent=11 // pred_region
          _
        $region52: #{tpu_custom_call.1} parent=11 // pred_fallthru
          _
        // Predicated region
        $region53: #{tpu_custom_call.1} parent=11 // pred_check
          %p361 = pneg %p282
        $region54: #{tpu_custom_call.1} parent=11 // pred_check_branch
          %363 = sbr.rel (%p361) target = $region56
        $region55: #{tpu_custom_call.1} parent=11 // pred_region
          _
        $region56: #{tpu_custom_call.1} parent=11 // pred_fallthru
          _
      $region12: #{tpu_custom_call.1} parent=5 // pred_fallthru
        _
      %p364 = scmp.lt.s32.totalorder %s25, 2
      // Predicated region
      $region57: #{tpu_custom_call.1} parent=5 // pred_check
        %p365 = pneg %p364
      $region58: #{tpu_custom_call.1} parent=5 // pred_check_branch
        %367 = sbr.rel (%p365) target = $region60
      $region59: #{tpu_custom_call.1} parent=5 // pred_region
        // Predicated region
        $region61: #{tpu_custom_call.1} parent=59 // pred_check
          %p368 = pneg %p45
        $region62: #{tpu_custom_call.1} parent=59 // pred_check_branch
          %370 = sbr.rel (%p368) target = $region64
        $region63: #{tpu_custom_call.1} parent=59 // pred_region
          %s371 = sand.u32 %s35, 1
          %s372 = scalar_lea.sflag [#allocation3], %s371
          %s373 = sand.u32 %s35, 1
          %s374 = smul.addr %s373, 8
          %s375 = scalar_lea.vmem [#allocation2], %s374
          %s377 = ssub.s32 128, 128
          %378 = vsyncadd %s372, %s377
          %s379 = smul.addr %s25, 128
          %s380 = scalar_lea.hbm %s0, %s379
          %s382 = sshll.u32 %s375, 4
          %s383 = int_to_ptr.vmem [resolvable:$true] %s382
          %385 = dma.hbm_to_vmem [thread:$0]  %s380, 128, %s383, %s372
        $region64: #{tpu_custom_call.1} parent=59 // pred_fallthru
          _
      $region60: #{tpu_custom_call.1} parent=5 // pred_fallthru
        _
      %p386 = scmp.le.s32.totalorder 1, %s25
      %p387 = scmp.lt.s32.totalorder %s25, 3
      %p388 = pnand %p386, %p387
      %p389 = pneg %p388
      // Predicated region
      $region65: #{tpu_custom_call.1} parent=5 // pred_check
        _
      $region66: #{tpu_custom_call.1} parent=5 // pred_check_branch
        %391 = sbr.rel (%p388) target = $region68
      $region67: #{tpu_custom_call.1} parent=5 // pred_region
        %s392 = ssub.s32 %s25, 1
        %s393 = sand.u32 %s38, 1
        %s394 = scalar_lea.sflag [#allocation3], %s393
        %s395 = sand.u32 %s38, 1
        %s396 = smul.addr %s395, 8
        %s397 = scalar_lea.vmem [#allocation2], %s396
        // Predicated region
        $region69: #{tpu_custom_call.1} parent=67 // pred_check
          %p398 = pneg %p51
        $region70: #{tpu_custom_call.1} parent=67 // pred_check_branch
          %400 = sbr.rel (%p398) target = $region72
        $region71: #{tpu_custom_call.1} parent=67 // pred_region
          %401 = dma.done %s394, 128
        $region72: #{tpu_custom_call.1} parent=67 // pred_fallthru
          _
        // Predicated region
        $region73: #{tpu_custom_call.1} parent=67 // pred_check
          %p402 = pneg %p240
        $region74: #{tpu_custom_call.1} parent=67 // pred_check_branch
          %404 = sbr.rel (%p402) target = $region76
        $region75: #{tpu_custom_call.1} parent=67 // pred_region
          %405 = dma.done [#allocation6], 16
        $region76: #{tpu_custom_call.1} parent=67 // pred_fallthru
          _
        %s406 = sand.u32 %s38, 1
        %s407 = scalar_lea.sflag [#allocation3], %s406
        %s408 = sand.u32 %s38, 1
        %s409 = smul.addr %s408, 8
        %s410 = scalar_lea.vmem [#allocation2], %s409
        %p411 = pneg %p51
        %p412 = pneg %p48
        %p413 = pneg %p72
        %p414 = pneg %p69
        %p415 = pneg %p93
        %p416 = pneg %p90
        %p417 = pneg %p114
        %p418 = pneg %p111
        %p419 = pneg %p135
        %p420 = pneg %p132
        %p421 = pneg %p156
        %p422 = pneg %p153
        %p423 = pneg %p177
        %p424 = pneg %p174
        %p425 = pneg %p198
        %p426 = pneg %p195
        %p427 = pneg %p219
        %p428 = pneg %p216
        %p429 = pneg %p240
        %p430 = pneg %p237
        %p431 = pneg %p261
        %p432 = pneg %p258
        %p433 = pneg %p282
        %p434 = pneg %p279
        %p435 = pneg %p308
        %p436 = pneg %p305
        %s437 = sand.u32 %s295, 1
        %s438 = scalar_lea.sflag [#allocation4], %s437
        %s439 = sand.u32 %s295, 1
        %s440 = smul.addr %s439, 8
        %s441 = scalar_lea.vmem [#allocation7], %s440
        %v442 = vld [vmem:[%s397] sm:$0xff]
        %vm443 = vcmask 261120
        %v444 = vsel %vm443, %v442, 0.0
        %445 = vadd.xlane.f32.xlu0 %v444
        %v446 = vpop.xlane.xlu0 %445
        %v447 = vrcp.pop 32.0
        %v448 = vmul.f32 %v446, %v447
        %v449 = vsub.f32 %v442, %v448
        %v450 = vmul.f32 %v449, %v449
        %v451 = vsel %vm443, %v450, 0.0
        %452 = vadd.xlane.f32.xlu0 %v451
        %v453 = vpop.xlane.xlu0 %452
        %v454 = vmul.f32 %v453, %v447
        %v455 = vadd.f32 %v454, 1e-05
        %v456 = vrsqrt.pop %v455
        %v457 = vmul.f32 %v449, %v456
        %v458 = vld [vmem:[%s1] sm:$0x1]
        %v460 = vlaneseq
        %v461 = vshrl.u32 %v460, 7
        %v462 = vsub.s32 0, %v461
        %v463 = vrot.slane %v458, %v462
        %v465 = vmul.f32 %v457, %v463
        %v466 = vld [vmem:[%s2] sm:$0x1]
        %v468 = vlaneseq
        %v469 = vshrl.u32 %v468, 7
        %v470 = vsub.s32 0, %v469
        %v471 = vrot.slane %v466, %v470
        %v473 = vadd.f32 %v465, %v471
        %v474 = vld [vmem:[%s3] sm:$0xff]
        %v475 = vld [vmem:[%s3 + $0x8] sm:$0xff]
        %v476 = vld [vmem:[%s3 + $0x10] sm:$0xff]
        %v477 = vld [vmem:[%s3 + $0x18] sm:$0xff]
        %v479 = vsel %vm443, %v473, 0
        %481 = vmatprep.subr.mxu0 0.0
        %482 = vmatpush1.msra.mxu0 %v474
        %483 = vmatprep.subr.mxu0 0.0
        %484 = vmatpush1.msra.mxu0 %v475
        %485 = vmatprep.subr.mxu0 0.0
        %486 = vmatpush1.msra.mxu0 %v476
        %487 = vmatprep.subr.mxu0 0.0
        %488 = vmatpush1.msra.mxu0 %v477
        %489 = vmatprep.subr.mxu0 0.0
        %490 = vmatpush1.msra.mxu0 0.0
        %491 = vmatprep.subr.mxu0 0.0
        %492 = vmatpush1.msra.mxu0 0.0
        %493 = vmatprep.subr.mxu0 0.0
        %494 = vmatpush1.msra.mxu0 0.0
        %495 = vmatprep.subr.mxu0 0.0
        %496 = vmatpush1.msra.mxu0 0.0
        %497 = vmatprep.subr.mxu0 0.0
        %498 = vmatpush1.msra.mxu0 0.0
        %499 = vmatprep.subr.mxu0 0.0
        %500 = vmatpush1.msra.mxu0 0.0
        %501 = vmatprep.subr.mxu0 0.0
        %502 = vmatpush1.msra.mxu0 0.0
        %503 = vmatprep.subr.mxu0 0.0
        %504 = vmatpush1.msra.mxu0 0.0
        %505 = vmatprep.subr.mxu0 0.0
        %506 = vmatpush1.msra.mxu0 0.0
        %507 = vmatprep.subr.mxu0 0.0
        %508 = vmatpush1.msra.mxu0 0.0
        %509 = vmatprep.subr.mxu0 0.0
        %510 = vmatpush1.msra.mxu0 0.0
        %511 = vmatprep.subr.mxu0 0.0
        %512 = vmatpush1.msra.mxu0 0.0
        %513 = vmatprep.subr.mxu0 0.0
        %514 = vmatpush1.msra.mxu0 0.0
        %515 = vmatprep.subr.mxu0 0.0
        %516 = vmatpush1.msra.mxu0 0.0
        %517 = vmatprep.subr.mxu0 0.0
        %518 = vmatpush1.msra.mxu0 0.0
        %519 = vmatprep.subr.mxu0 0.0
        %520 = vmatpush1.msra.mxu0 0.0
        %521 = vmatprep.subr.mxu0 0.0
        %522 = vmatpush1.msra.mxu0 0.0
        %523 = vmatprep.subr.mxu0 0.0
        %524 = vmatpush1.msra.mxu0 0.0
        %525 = vmatprep.subr.mxu0 0.0
        %526 = vmatpush1.msra.mxu0 0.0
        %527 = vmatprep.subr.mxu0 0.0
        %528 = vmatpush1.msra.mxu0 0.0
        %529 = vmatprep.subr.mxu0 0.0
        %530 = vmatpush1.msra.mxu0 0.0
        %531 = vmatprep.subr.mxu0 0.0
        %532 = vmatpush1.msra.mxu0 0.0
        %533 = vmatprep.subr.mxu0 0.0
        %534 = vmatpush1.msra.mxu0 0.0
        %535 = vmatprep.subr.mxu0 0.0
        %536 = vmatpush1.msra.mxu0 0.0
        %537 = vmatprep.subr.mxu0 0.0
        %538 = vmatpush1.msra.mxu0 0.0
        %539 = vmatprep.subr.mxu0 0.0
        %540 = vmatpush1.msra.mxu0 0.0
        %541 = vmatprep.subr.mxu0 0.0
        %542 = vmatpush1.msra.mxu0 0.0
        %543 = vmatprep.subr.mxu0 0.0
        %544 = vmatpush1.msra.mxu0 0.0
        %545 = vmatprep.mubr.f32.mxu0 0.0
        %546 = vmatmul.mubr.f32.gmra.mrb[0].mxu0 %v479
        %v547 = vpop.f32.mrb[0].mxu0
        %v548 = vadd.f32 0.0, %v547
        %v549 = vpop.f32.mrb[0].mxu0
        %550 = vdwg.mxu0
        %552 = vrot.lane.b32.xlu0 %v548, 120
        %v553 = vpop.permute.xlu0 %552
        %554 = vrot.lane.b32.xlu0 %v548, 112
        %v555 = vpop.permute.xlu0 %554
        %556 = vrot.lane.b32.xlu0 %v548, 104
        %v557 = vpop.permute.xlu0 %556
        %558 = vrot.lane.b32.xlu0 %v548, 96
        %v559 = vpop.permute.xlu0 %558
        %vm560 = vcmask 64512
        %v561 = vsel %vm560, %v548, 0
        %v563 = vsel %vm560, %v559, 0
        %565 = vmatprep.subr.mxu0 0.0
        %566 = vmatpush1.xpose.msra.mxu0 %v563
        %567 = vmatprep.subr.mxu0 0.0
        %568 = vmatpush1.xpose.msra.mxu0 0.0
        %569 = vmatprep.subr.mxu0 0.0
        %570 = vmatpush1.xpose.msra.mxu0 0.0
        %571 = vmatprep.subr.mxu0 0.0
        %572 = vmatpush1.xpose.msra.mxu0 0.0
        %573 = vmatprep.subr.mxu0 0.0
        %574 = vmatpush1.xpose.msra.mxu0 0.0
        %575 = vmatprep.subr.mxu0 0.0
        %576 = vmatpush1.xpose.msra.mxu0 0.0
        %577 = vmatprep.subr.mxu0 0.0
        %578 = vmatpush1.xpose.msra.mxu0 0.0
        %579 = vmatprep.subr.mxu0 0.0
        %580 = vmatpush1.xpose.msra.mxu0 0.0
        %581 = vmatprep.subr.mxu0 0.0
        %582 = vmatpush1.xpose.msra.mxu0 0.0
        %583 = vmatprep.subr.mxu0 0.0
        %584 = vmatpush1.xpose.msra.mxu0 0.0
        %585 = vmatprep.subr.mxu0 0.0
        %586 = vmatpush1.xpose.msra.mxu0 0.0
        %587 = vmatprep.subr.mxu0 0.0
        %588 = vmatpush1.xpose.msra.mxu0 0.0
        %589 = vmatprep.subr.mxu0 0.0
        %590 = vmatpush1.xpose.msra.mxu0 0.0
        %591 = vmatprep.subr.mxu0 0.0
        %592 = vmatpush1.xpose.msra.mxu0 0.0
        %593 = vmatprep.subr.mxu0 0.0
        %594 = vmatpush1.xpose.msra.mxu0 0.0
        %595 = vmatprep.subr.mxu0 0.0
        %596 = vmatpush1.xpose.msra.mxu0 0.0
        %597 = vmatprep.subr.mxu0 0.0
        %598 = vmatpush1.xpose.msra.mxu0 0.0
        %599 = vmatprep.subr.mxu0 0.0
        %600 = vmatpush1.xpose.msra.mxu0 0.0
        %601 = vmatprep.subr.mxu0 0.0
        %602 = vmatpush1.xpose.msra.mxu0 0.0
        %603 = vmatprep.subr.mxu0 0.0
        %604 = vmatpush1.xpose.msra.mxu0 0.0
        %605 = vmatprep.subr.mxu0 0.0
        %606 = vmatpush1.xpose.msra.mxu0 0.0
        %607 = vmatprep.subr.mxu0 0.0
        %608 = vmatpush1.xpose.msra.mxu0 0.0
        %609 = vmatprep.subr.mxu0 0.0
        %610 = vmatpush1.xpose.msra.mxu0 0.0
        %611 = vmatprep.subr.mxu0 0.0
        %612 = vmatpush1.xpose.msra.mxu0 0.0
        %613 = vmatprep.subr.mxu0 0.0
        %614 = vmatpush1.xpose.msra.mxu0 0.0
        %615 = vmatprep.subr.mxu0 0.0
        %616 = vmatpush1.xpose.msra.mxu0 0.0
        %617 = vmatprep.subr.mxu0 0.0
        %618 = vmatpush1.xpose.msra.mxu0 0.0
        %619 = vmatprep.subr.mxu0 0.0
        %620 = vmatpush1.xpose.msra.mxu0 0.0
        %621 = vmatprep.subr.mxu0 0.0
        %622 = vmatpush1.xpose.msra.mxu0 0.0
        %623 = vmatprep.subr.mxu0 0.0
        %624 = vmatpush1.xpose.msra.mxu0 0.0
        %625 = vmatprep.subr.mxu0 0.0
        %626 = vmatpush1.xpose.msra.mxu0 0.0
        %627 = vmatprep.subr.mxu0 0.0
        %628 = vmatpush1.xpose.msra.mxu0 0.0
        %629 = vmatprep.mubr.f32.mxu0 0.0
        %630 = vmatmul.mubr.f32.gmra.mrb[0].mxu0 %v561
        %v631 = vpop.f32.mrb[0].mxu0
        %v632 = vadd.f32 0.0, %v631
        %v633 = vpop.f32.mrb[0].mxu0
        %634 = vdwg.mxu0
        %635 = vrot.lane.b32.xlu0 %v553, 96
        %v636 = vpop.permute.xlu0 %635
        %v637 = vsel %vm560, %v553, 0
        %v639 = vsel %vm560, %v636, 0
        %641 = vmatprep.subr.mxu0 0.0
        %642 = vmatpush1.xpose.msra.mxu0 %v639
        %643 = vmatprep.subr.mxu0 0.0
        %644 = vmatpush1.xpose.msra.mxu0 0.0
        %645 = vmatprep.subr.mxu0 0.0
        %646 = vmatpush1.xpose.msra.mxu0 0.0
        %647 = vmatprep.subr.mxu0 0.0
        %648 = vmatpush1.xpose.msra.mxu0 0.0
        %649 = vmatprep.subr.mxu0 0.0
        %650 = vmatpush1.xpose.msra.mxu0 0.0
        %651 = vmatprep.subr.mxu0 0.0
        %652 = vmatpush1.xpose.msra.mxu0 0.0
        %653 = vmatprep.subr.mxu0 0.0
        %654 = vmatpush1.xpose.msra.mxu0 0.0
        %655 = vmatprep.subr.mxu0 0.0
        %656 = vmatpush1.xpose.msra.mxu0 0.0
        %657 = vmatprep.subr.mxu0 0.0
        %658 = vmatpush1.xpose.msra.mxu0 0.0
        %659 = vmatprep.subr.mxu0 0.0
        %660 = vmatpush1.xpose.msra.mxu0 0.0
        %661 = vmatprep.subr.mxu0 0.0
        %662 = vmatpush1.xpose.msra.mxu0 0.0
        %663 = vmatprep.subr.mxu0 0.0
        %664 = vmatpush1.xpose.msra.mxu0 0.0
        %665 = vmatprep.subr.mxu0 0.0
        %666 = vmatpush1.xpose.msra.mxu0 0.0
        %667 = vmatprep.subr.mxu0 0.0
        %668 = vmatpush1.xpose.msra.mxu0 0.0
        %669 = vmatprep.subr.mxu0 0.0
        %670 = vmatpush1.xpose.msra.mxu0 0.0
        %671 = vmatprep.subr.mxu0 0.0
        %672 = vmatpush1.xpose.msra.mxu0 0.0
        %673 = vmatprep.subr.mxu0 0.0
        %674 = vmatpush1.xpose.msra.mxu0 0.0
        %675 = vmatprep.subr.mxu0 0.0
        %676 = vmatpush1.xpose.msra.mxu0 0.0
        %677 = vmatprep.subr.mxu0 0.0
        %678 = vmatpush1.xpose.msra.mxu0 0.0
        %679 = vmatprep.subr.mxu0 0.0
        %680 = vmatpush1.xpose.msra.mxu0 0.0
        %681 = vmatprep.subr.mxu0 0.0
        %682 = vmatpush1.xpose.msra.mxu0 0.0
        %683 = vmatprep.subr.mxu0 0.0
        %684 = vmatpush1.xpose.msra.mxu0 0.0
        %685 = vmatprep.subr.mxu0 0.0
        %686 = vmatpush1.xpose.msra.mxu0 0.0
        %687 = vmatprep.subr.mxu0 0.0
        %688 = vmatpush1.xpose.msra.mxu0 0.0
        %689 = vmatprep.subr.mxu0 0.0
        %690 = vmatpush1.xpose.msra.mxu0 0.0
        %691 = vmatprep.subr.mxu0 0.0
        %692 = vmatpush1.xpose.msra.mxu0 0.0
        %693 = vmatprep.subr.mxu0 0.0
        %694 = vmatpush1.xpose.msra.mxu0 0.0
        %695 = vmatprep.subr.mxu0 0.0
        %696 = vmatpush1.xpose.msra.mxu0 0.0
        %697 = vmatprep.subr.mxu0 0.0
        %698 = vmatpush1.xpose.msra.mxu0 0.0
        %699 = vmatprep.subr.mxu0 0.0
        %700 = vmatpush1.xpose.msra.mxu0 0.0
        %701 = vmatprep.subr.mxu0 0.0
        %702 = vmatpush1.xpose.msra.mxu0 0.0
        %703 = vmatprep.subr.mxu0 0.0
        %704 = vmatpush1.xpose.msra.mxu0 0.0
        %705 = vmatprep.mubr.f32.mxu0 0.0
        %706 = vmatmul.mubr.f32.gmra.mrb[0].mxu0 %v637
        %v707 = vpop.f32.mrb[0].mxu0
        %v708 = vadd.f32 0.0, %v707
        %v709 = vpop.f32.mrb[0].mxu0
        %710 = vdwg.mxu0
        %711 = vrot.lane.b32.xlu0 %v555, 96
        %v712 = vpop.permute.xlu0 %711
        %v713 = vsel %vm560, %v555, 0
        %v715 = vsel %vm560, %v712, 0
        %717 = vmatprep.subr.mxu0 0.0
        %718 = vmatpush1.xpose.msra.mxu0 %v715
        %719 = vmatprep.subr.mxu0 0.0
        %720 = vmatpush1.xpose.msra.mxu0 0.0
        %721 = vmatprep.subr.mxu0 0.0
        %722 = vmatpush1.xpose.msra.mxu0 0.0
        %723 = vmatprep.subr.mxu0 0.0
        %724 = vmatpush1.xpose.msra.mxu0 0.0
        %725 = vmatprep.subr.mxu0 0.0
        %726 = vmatpush1.xpose.msra.mxu0 0.0
        %727 = vmatprep.subr.mxu0 0.0
        %728 = vmatpush1.xpose.msra.mxu0 0.0
        %729 = vmatprep.subr.mxu0 0.0
        %730 = vmatpush1.xpose.msra.mxu0 0.0
        %731 = vmatprep.subr.mxu0 0.0
        %732 = vmatpush1.xpose.msra.mxu0 0.0
        %733 = vmatprep.subr.mxu0 0.0
        %734 = vmatpush1.xpose.msra.mxu0 0.0
        %735 = vmatprep.subr.mxu0 0.0
        %736 = vmatpush1.xpose.msra.mxu0 0.0
        %737 = vmatprep.subr.mxu0 0.0
        %738 = vmatpush1.xpose.msra.mxu0 0.0
        %739 = vmatprep.subr.mxu0 0.0
        %740 = vmatpush1.xpose.msra.mxu0 0.0
        %741 = vmatprep.subr.mxu0 0.0
        %742 = vmatpush1.xpose.msra.mxu0 0.0
        %743 = vmatprep.subr.mxu0 0.0
        %744 = vmatpush1.xpose.msra.mxu0 0.0
        %745 = vmatprep.subr.mxu0 0.0
        %746 = vmatpush1.xpose.msra.mxu0 0.0
        %747 = vmatprep.subr.mxu0 0.0
        %748 = vmatpush1.xpose.msra.mxu0 0.0
        %749 = vmatprep.subr.mxu0 0.0
        %750 = vmatpush1.xpose.msra.mxu0 0.0
        %751 = vmatprep.subr.mxu0 0.0
        %752 = vmatpush1.xpose.msra.mxu0 0.0
        %753 = vmatprep.subr.mxu0 0.0
        %754 = vmatpush1.xpose.msra.mxu0 0.0
        %755 = vmatprep.subr.mxu0 0.0
        %756 = vmatpush1.xpose.msra.mxu0 0.0
        %757 = vmatprep.subr.mxu0 0.0
        %758 = vmatpush1.xpose.msra.mxu0 0.0
        %759 = vmatprep.subr.mxu0 0.0
        %760 = vmatpush1.xpose.msra.mxu0 0.0
        %761 = vmatprep.subr.mxu0 0.0
        %762 = vmatpush1.xpose.msra.mxu0 0.0
        %763 = vmatprep.subr.mxu0 0.0
        %764 = vmatpush1.xpose.msra.mxu0 0.0
        %765 = vmatprep.subr.mxu0 0.0
        %766 = vmatpush1.xpose.msra.mxu0 0.0
        %767 = vmatprep.subr.mxu0 0.0
        %768 = vmatpush1.xpose.msra.mxu0 0.0
        %769 = vmatprep.subr.mxu0 0.0
        %770 = vmatpush1.xpose.msra.mxu0 0.0
        %771 = vmatprep.subr.mxu0 0.0
        %772 = vmatpush1.xpose.msra.mxu0 0.0
        %773 = vmatprep.subr.mxu0 0.0
        %774 = vmatpush1.xpose.msra.mxu0 0.0
        %775 = vmatprep.subr.mxu0 0.0
        %776 = vmatpush1.xpose.msra.mxu0 0.0
        %777 = vmatprep.subr.mxu0 0.0
        %778 = vmatpush1.xpose.msra.mxu0 0.0
        %779 = vmatprep.subr.mxu0 0.0
        %780 = vmatpush1.xpose.msra.mxu0 0.0
        %781 = vmatprep.mubr.f32.mxu0 0.0
        %782 = vmatmul.mubr.f32.gmra.mrb[0].mxu0 %v713
        %v783 = vpop.f32.mrb[0].mxu0
        %v784 = vadd.f32 0.0, %v783
        %v785 = vpop.f32.mrb[0].mxu0
        %786 = vdwg.mxu0
        %787 = vrot.lane.b32.xlu0 %v557, 96
        %v788 = vpop.permute.xlu0 %787
        %v789 = vsel %vm560, %v557, 0
        %v791 = vsel %vm560, %v788, 0
        %793 = vmatprep.subr.mxu0 0.0
        %794 = vmatpush1.xpose.msra.mxu0 %v791
        %795 = vmatprep.subr.mxu0 0.0
        %796 = vmatpush1.xpose.msra.mxu0 0.0
        %797 = vmatprep.subr.mxu0 0.0
        %798 = vmatpush1.xpose.msra.mxu0 0.0
        %799 = vmatprep.subr.mxu0 0.0
        %800 = vmatpush1.xpose.msra.mxu0 0.0
        %801 = vmatprep.subr.mxu0 0.0
        %802 = vmatpush1.xpose.msra.mxu0 0.0
        %803 = vmatprep.subr.mxu0 0.0
        %804 = vmatpush1.xpose.msra.mxu0 0.0
        %805 = vmatprep.subr.mxu0 0.0
        %806 = vmatpush1.xpose.msra.mxu0 0.0
        %807 = vmatprep.subr.mxu0 0.0
        %808 = vmatpush1.xpose.msra.mxu0 0.0
        %809 = vmatprep.subr.mxu0 0.0
        %810 = vmatpush1.xpose.msra.mxu0 0.0
        %811 = vmatprep.subr.mxu0 0.0
        %812 = vmatpush1.xpose.msra.mxu0 0.0
        %813 = vmatprep.subr.mxu0 0.0
        %814 = vmatpush1.xpose.msra.mxu0 0.0
        %815 = vmatprep.subr.mxu0 0.0
        %816 = vmatpush1.xpose.msra.mxu0 0.0
        %817 = vmatprep.subr.mxu0 0.0
        %818 = vmatpush1.xpose.msra.mxu0 0.0
        %819 = vmatprep.subr.mxu0 0.0
        %820 = vmatpush1.xpose.msra.mxu0 0.0
        %821 = vmatprep.subr.mxu0 0.0
        %822 = vmatpush1.xpose.msra.mxu0 0.0
        %823 = vmatprep.subr.mxu0 0.0
        %824 = vmatpush1.xpose.msra.mxu0 0.0
        %825 = vmatprep.subr.mxu0 0.0
        %826 = vmatpush1.xpose.msra.mxu0 0.0
        %827 = vmatprep.subr.mxu0 0.0
        %828 = vmatpush1.xpose.msra.mxu0 0.0
        %829 = vmatprep.subr.mxu0 0.0
        %830 = vmatpush1.xpose.msra.mxu0 0.0
        %831 = vmatprep.subr.mxu0 0.0
        %832 = vmatpush1.xpose.msra.mxu0 0.0
        %833 = vmatprep.subr.mxu0 0.0
        %834 = vmatpush1.xpose.msra.mxu0 0.0
        %835 = vmatprep.subr.mxu0 0.0
        %836 = vmatpush1.xpose.msra.mxu0 0.0
        %837 = vmatprep.subr.mxu0 0.0
        %838 = vmatpush1.xpose.msra.mxu0 0.0
        %839 = vmatprep.subr.mxu0 0.0
        %840 = vmatpush1.xpose.msra.mxu0 0.0
        %841 = vmatprep.subr.mxu0 0.0
        %842 = vmatpush1.xpose.msra.mxu0 0.0
        %843 = vmatprep.subr.mxu0 0.0
        %844 = vmatpush1.xpose.msra.mxu0 0.0
        %845 = vmatprep.subr.mxu0 0.0
        %846 = vmatpush1.xpose.msra.mxu0 0.0
        %847 = vmatprep.subr.mxu0 0.0
        %848 = vmatpush1.xpose.msra.mxu0 0.0
        %849 = vmatprep.subr.mxu0 0.0
        %850 = vmatpush1.xpose.msra.mxu0 0.0
        %851 = vmatprep.subr.mxu0 0.0
        %852 = vmatpush1.xpose.msra.mxu0 0.0
        %853 = vmatprep.subr.mxu0 0.0
        %854 = vmatpush1.xpose.msra.mxu0 0.0
        %855 = vmatprep.subr.mxu0 0.0
        %856 = vmatpush1.xpose.msra.mxu0 0.0
        %857 = vmatprep.mubr.f32.mxu0 0.0
        %858 = vmatmul.mubr.f32.gmra.mrb[0].mxu0 %v789
        %v859 = vpop.f32.mrb[0].mxu0
        %v860 = vadd.f32 0.0, %v859
        %v861 = vpop.f32.mrb[0].mxu0
        %862 = vdwg.mxu0
        %v863 = vsel %vm560, %v632, -inf
        %864 = vmax.xlane.f32.xlu0 %v863
        %v865 = vpop.xlane.xlu0 %864
        %v866 = vsel %vm560, %v708, -inf
        %867 = vmax.xlane.f32.xlu0 %v866
        %v868 = vpop.xlane.xlu0 %867
        %v869 = vsel %vm560, %v784, -inf
        %870 = vmax.xlane.f32.xlu0 %v869
        %v871 = vpop.xlane.xlu0 %870
        %v872 = vsel %vm560, %v860, -inf
        %873 = vmax.xlane.f32.xlu0 %v872
        %v874 = vpop.xlane.xlu0 %873
        %v875 = vsub.f32 %v632, %v865
        %v876 = vsub.f32 %v708, %v868
        %v877 = vsub.f32 %v784, %v871
        %v878 = vsub.f32 %v860, %v874
        %v879 = vmul.f32 %v875, 1.442695
        %v880 = vpow.pop %v879
        %v881 = vmul.f32 %v876, 1.442695
        %v882 = vpow.pop %v881
        %v883 = vmul.f32 %v877, 1.442695
        %v884 = vpow.pop %v883
        %v885 = vmul.f32 %v878, 1.442695
        %v886 = vpow.pop %v885
        %v887 = vsel %vm560, %v880, 0.0
        %888 = vadd.xlane.f32.xlu0 %v887
        %v889 = vpop.xlane.xlu0 %888
        %v890 = vsel %vm560, %v882, 0.0
        %891 = vadd.xlane.f32.xlu0 %v890
        %v892 = vpop.xlane.xlu0 %891
        %v893 = vsel %vm560, %v884, 0.0
        %894 = vadd.xlane.f32.xlu0 %v893
        %v895 = vpop.xlane.xlu0 %894
        %v896 = vsel %vm560, %v886, 0.0
        %897 = vadd.xlane.f32.xlu0 %v896
        %v898 = vpop.xlane.xlu0 %897
        %v899 = vrcp.pop %v889
        %v900 = vrcp.pop %v892
        %v901 = vrcp.pop %v895
        %v902 = vrcp.pop %v898
        %v903 = vmul.f32 %v880, %v899
        %v904 = vmul.f32 %v882, %v900
        %v905 = vmul.f32 %v884, %v901
        %v906 = vmul.f32 %v886, %v902
        %907 = vrot.lane.b32.xlu0 %v548, 64
        %v908 = vpop.permute.xlu0 %907
        %v911 = vsel %vm560, %v903, 0
        %913 = vmatprep.subr.mxu0 0.0
        %914 = vmatpush1.msra.mxu0 %v908
        %915 = vmatprep.subr.mxu0 0.0
        %916 = vmatpush1.msra.mxu0 0.0
        %917 = vmatprep.subr.mxu0 0.0
        %918 = vmatpush1.msra.mxu0 0.0
        %919 = vmatprep.subr.mxu0 0.0
        %920 = vmatpush1.msra.mxu0 0.0
        %921 = vmatprep.subr.mxu0 0.0
        %922 = vmatpush1.msra.mxu0 0.0
        %923 = vmatprep.subr.mxu0 0.0
        %924 = vmatpush1.msra.mxu0 0.0
        %925 = vmatprep.subr.mxu0 0.0
        %926 = vmatpush1.msra.mxu0 0.0
        %927 = vmatprep.subr.mxu0 0.0
        %928 = vmatpush1.msra.mxu0 0.0
        %929 = vmatprep.subr.mxu0 0.0
        %930 = vmatpush1.msra.mxu0 0.0
        %931 = vmatprep.subr.mxu0 0.0
        %932 = vmatpush1.msra.mxu0 0.0
        %933 = vmatprep.subr.mxu0 0.0
        %934 = vmatpush1.msra.mxu0 0.0
        %935 = vmatprep.subr.mxu0 0.0
        %936 = vmatpush1.msra.mxu0 0.0
        %937 = vmatprep.subr.mxu0 0.0
        %938 = vmatpush1.msra.mxu0 0.0
        %939 = vmatprep.subr.mxu0 0.0
        %940 = vmatpush1.msra.mxu0 0.0
        %941 = vmatprep.subr.mxu0 0.0
        %942 = vmatpush1.msra.mxu0 0.0
        %943 = vmatprep.subr.mxu0 0.0
        %944 = vmatpush1.msra.mxu0 0.0
        %945 = vmatprep.subr.mxu0 0.0
        %946 = vmatpush1.msra.mxu0 0.0
        %947 = vmatprep.subr.mxu0 0.0
        %948 = vmatpush1.msra.mxu0 0.0
        %949 = vmatprep.subr.mxu0 0.0
        %950 = vmatpush1.msra.mxu0 0.0
        %951 = vmatprep.subr.mxu0 0.0
        %952 = vmatpush1.msra.mxu0 0.0
        %953 = vmatprep.subr.mxu0 0.0
        %954 = vmatpush1.msra.mxu0 0.0
        %955 = vmatprep.subr.mxu0 0.0
        %956 = vmatpush1.msra.mxu0 0.0
        %957 = vmatprep.subr.mxu0 0.0
        %958 = vmatpush1.msra.mxu0 0.0
        %959 = vmatprep.subr.mxu0 0.0
        %960 = vmatpush1.msra.mxu0 0.0
        %961 = vmatprep.subr.mxu0 0.0
        %962 = vmatpush1.msra.mxu0 0.0
        %963 = vmatprep.subr.mxu0 0.0
        %964 = vmatpush1.msra.mxu0 0.0
        %965 = vmatprep.subr.mxu0 0.0
        %966 = vmatpush1.msra.mxu0 0.0
        %967 = vmatprep.subr.mxu0 0.0
        %968 = vmatpush1.msra.mxu0 0.0
        %969 = vmatprep.subr.mxu0 0.0
        %970 = vmatpush1.msra.mxu0 0.0
        %971 = vmatprep.subr.mxu0 0.0
        %972 = vmatpush1.msra.mxu0 0.0
        %973 = vmatprep.subr.mxu0 0.0
        %974 = vmatpush1.msra.mxu0 0.0
        %975 = vmatprep.subr.mxu0 0.0
        %976 = vmatpush1.msra.mxu0 0.0
        %977 = vmatprep.mubr.f32.mxu0 0.0
        %978 = vmatmul.mubr.f32.gmra.mrb[0].mxu0 %v911
        %v979 = vpop.f32.mrb[0].mxu0
        %v980 = vadd.f32 0.0, %v979
        %v981 = vpop.f32.mrb[0].mxu0
        %982 = vdwg.mxu0
        %983 = vrot.lane.b32.xlu0 %v553, 64
        %v984 = vpop.permute.xlu0 %983
        %v987 = vsel %vm560, %v904, 0
        %989 = vmatprep.subr.mxu0 0.0
        %990 = vmatpush1.msra.mxu0 %v984
        %991 = vmatprep.subr.mxu0 0.0
        %992 = vmatpush1.msra.mxu0 0.0
        %993 = vmatprep.subr.mxu0 0.0
        %994 = vmatpush1.msra.mxu0 0.0
        %995 = vmatprep.subr.mxu0 0.0
        %996 = vmatpush1.msra.mxu0 0.0
        %997 = vmatprep.subr.mxu0 0.0
        %998 = vmatpush1.msra.mxu0 0.0
        %999 = vmatprep.subr.mxu0 0.0
        %1000 = vmatpush1.msra.mxu0 0.0
        %1001 = vmatprep.subr.mxu0 0.0
        %1002 = vmatpush1.msra.mxu0 0.0
        %1003 = vmatprep.subr.mxu0 0.0
        %1004 = vmatpush1.msra.mxu0 0.0
        %1005 = vmatprep.subr.mxu0 0.0
        %1006 = vmatpush1.msra.mxu0 0.0
        %1007 = vmatprep.subr.mxu0 0.0
        %1008 = vmatpush1.msra.mxu0 0.0
        %1009 = vmatprep.subr.mxu0 0.0
        %1010 = vmatpush1.msra.mxu0 0.0
        %1011 = vmatprep.subr.mxu0 0.0
        %1012 = vmatpush1.msra.mxu0 0.0
        %1013 = vmatprep.subr.mxu0 0.0
        %1014 = vmatpush1.msra.mxu0 0.0
        %1015 = vmatprep.subr.mxu0 0.0
        %1016 = vmatpush1.msra.mxu0 0.0
        %1017 = vmatprep.subr.mxu0 0.0
        %1018 = vmatpush1.msra.mxu0 0.0
        %1019 = vmatprep.subr.mxu0 0.0
        %1020 = vmatpush1.msra.mxu0 0.0
        %1021 = vmatprep.subr.mxu0 0.0
        %1022 = vmatpush1.msra.mxu0 0.0
        %1023 = vmatprep.subr.mxu0 0.0
        %1024 = vmatpush1.msra.mxu0 0.0
        %1025 = vmatprep.subr.mxu0 0.0
        %1026 = vmatpush1.msra.mxu0 0.0
        %1027 = vmatprep.subr.mxu0 0.0
        %1028 = vmatpush1.msra.mxu0 0.0
        %1029 = vmatprep.subr.mxu0 0.0
        %1030 = vmatpush1.msra.mxu0 0.0
        %1031 = vmatprep.subr.mxu0 0.0
        %1032 = vmatpush1.msra.mxu0 0.0
        %1033 = vmatprep.subr.mxu0 0.0
        %1034 = vmatpush1.msra.mxu0 0.0
        %1035 = vmatprep.subr.mxu0 0.0
        %1036 = vmatpush1.msra.mxu0 0.0
        %1037 = vmatprep.subr.mxu0 0.0
        %1038 = vmatpush1.msra.mxu0 0.0
        %1039 = vmatprep.subr.mxu0 0.0
        %1040 = vmatpush1.msra.mxu0 0.0
        %1041 = vmatprep.subr.mxu0 0.0
        %1042 = vmatpush1.msra.mxu0 0.0
        %1043 = vmatprep.subr.mxu0 0.0
        %1044 = vmatpush1.msra.mxu0 0.0
        %1045 = vmatprep.subr.mxu0 0.0
        %1046 = vmatpush1.msra.mxu0 0.0
        %1047 = vmatprep.subr.mxu0 0.0
        %1048 = vmatpush1.msra.mxu0 0.0
        %1049 = vmatprep.subr.mxu0 0.0
        %1050 = vmatpush1.msra.mxu0 0.0
        %1051 = vmatprep.subr.mxu0 0.0
        %1052 = vmatpush1.msra.mxu0 0.0
        %1053 = vmatprep.mubr.f32.mxu0 0.0
        %1054 = vmatmul.mubr.f32.gmra.mrb[0].mxu0 %v987
        %v1055 = vpop.f32.mrb[0].mxu0
        %v1056 = vadd.f32 0.0, %v1055
        %v1057 = vpop.f32.mrb[0].mxu0
        %1058 = vdwg.mxu0
        %1059 = vrot.lane.b32.xlu0 %v555, 64
        %v1060 = vpop.permute.xlu0 %1059
        %v1063 = vsel %vm560, %v905, 0
        %1065 = vmatprep.subr.mxu0 0.0
        %1066 = vmatpush1.msra.mxu0 %v1060
        %1067 = vmatprep.subr.mxu0 0.0
        %1068 = vmatpush1.msra.mxu0 0.0
        %1069 = vmatprep.subr.mxu0 0.0
        %1070 = vmatpush1.msra.mxu0 0.0
        %1071 = vmatprep.subr.mxu0 0.0
        %1072 = vmatpush1.msra.mxu0 0.0
        %1073 = vmatprep.subr.mxu0 0.0
        %1074 = vmatpush1.msra.mxu0 0.0
        %1075 = vmatprep.subr.mxu0 0.0
        %1076 = vmatpush1.msra.mxu0 0.0
        %1077 = vmatprep.subr.mxu0 0.0
        %1078 = vmatpush1.msra.mxu0 0.0
        %1079 = vmatprep.subr.mxu0 0.0
        %1080 = vmatpush1.msra.mxu0 0.0
        %1081 = vmatprep.subr.mxu0 0.0
        %1082 = vmatpush1.msra.mxu0 0.0
        %1083 = vmatprep.subr.mxu0 0.0
        %1084 = vmatpush1.msra.mxu0 0.0
        %1085 = vmatprep.subr.mxu0 0.0
        %1086 = vmatpush1.msra.mxu0 0.0
        %1087 = vmatprep.subr.mxu0 0.0
        %1088 = vmatpush1.msra.mxu0 0.0
        %1089 = vmatprep.subr.mxu0 0.0
        %1090 = vmatpush1.msra.mxu0 0.0
        %1091 = vmatprep.subr.mxu0 0.0
        %1092 = vmatpush1.msra.mxu0 0.0
        %1093 = vmatprep.subr.mxu0 0.0
        %1094 = vmatpush1.msra.mxu0 0.0
        %1095 = vmatprep.subr.mxu0 0.0
        %1096 = vmatpush1.msra.mxu0 0.0
        %1097 = vmatprep.subr.mxu0 0.0
        %1098 = vmatpush1.msra.mxu0 0.0
        %1099 = vmatprep.subr.mxu0 0.0
        %1100 = vmatpush1.msra.mxu0 0.0
        %1101 = vmatprep.subr.mxu0 0.0
        %1102 = vmatpush1.msra.mxu0 0.0
        %1103 = vmatprep.subr.mxu0 0.0
        %1104 = vmatpush1.msra.mxu0 0.0
        %1105 = vmatprep.subr.mxu0 0.0
        %1106 = vmatpush1.msra.mxu0 0.0
        %1107 = vmatprep.subr.mxu0 0.0
        %1108 = vmatpush1.msra.mxu0 0.0
        %1109 = vmatprep.subr.mxu0 0.0
        %1110 = vmatpush1.msra.mxu0 0.0
        %1111 = vmatprep.subr.mxu0 0.0
        %1112 = vmatpush1.msra.mxu0 0.0
        %1113 = vmatprep.subr.mxu0 0.0
        %1114 = vmatpush1.msra.mxu0 0.0
        %1115 = vmatprep.subr.mxu0 0.0
        %1116 = vmatpush1.msra.mxu0 0.0
        %1117 = vmatprep.subr.mxu0 0.0
        %1118 = vmatpush1.msra.mxu0 0.0
        %1119 = vmatprep.subr.mxu0 0.0
        %1120 = vmatpush1.msra.mxu0 0.0
        %1121 = vmatprep.subr.mxu0 0.0
        %1122 = vmatpush1.msra.mxu0 0.0
        %1123 = vmatprep.subr.mxu0 0.0
        %1124 = vmatpush1.msra.mxu0 0.0
        %1125 = vmatprep.subr.mxu0 0.0
        %1126 = vmatpush1.msra.mxu0 0.0
        %1127 = vmatprep.subr.mxu0 0.0
        %1128 = vmatpush1.msra.mxu0 0.0
        %1129 = vmatprep.mubr.f32.mxu0 0.0
        %1130 = vmatmul.mubr.f32.gmra.mrb[0].mxu0 %v1063
        %v1131 = vpop.f32.mrb[0].mxu0
        %v1132 = vadd.f32 0.0, %v1131
        %v1133 = vpop.f32.mrb[0].mxu0
        %1134 = vdwg.mxu0
        %1135 = vrot.lane.b32.xlu0 %v557, 64
        %v1136 = vpop.permute.xlu0 %1135
        %v1139 = vsel %vm560, %v906, 0
        %1141 = vmatprep.subr.mxu0 0.0
        %1142 = vmatpush1.msra.mxu0 %v1136
        %1143 = vmatprep.subr.mxu0 0.0
        %1144 = vmatpush1.msra.mxu0 0.0
        %1145 = vmatprep.subr.mxu0 0.0
        %1146 = vmatpush1.msra.mxu0 0.0
        %1147 = vmatprep.subr.mxu0 0.0
        %1148 = vmatpush1.msra.mxu0 0.0
        %1149 = vmatprep.subr.mxu0 0.0
        %1150 = vmatpush1.msra.mxu0 0.0
        %1151 = vmatprep.subr.mxu0 0.0
        %1152 = vmatpush1.msra.mxu0 0.0
        %1153 = vmatprep.subr.mxu0 0.0
        %1154 = vmatpush1.msra.mxu0 0.0
        %1155 = vmatprep.subr.mxu0 0.0
        %1156 = vmatpush1.msra.mxu0 0.0
        %1157 = vmatprep.subr.mxu0 0.0
        %1158 = vmatpush1.msra.mxu0 0.0
        %1159 = vmatprep.subr.mxu0 0.0
        %1160 = vmatpush1.msra.mxu0 0.0
        %1161 = vmatprep.subr.mxu0 0.0
        %1162 = vmatpush1.msra.mxu0 0.0
        %1163 = vmatprep.subr.mxu0 0.0
        %1164 = vmatpush1.msra.mxu0 0.0
        %1165 = vmatprep.subr.mxu0 0.0
        %1166 = vmatpush1.msra.mxu0 0.0
        %1167 = vmatprep.subr.mxu0 0.0
        %1168 = vmatpush1.msra.mxu0 0.0
        %1169 = vmatprep.subr.mxu0 0.0
        %1170 = vmatpush1.msra.mxu0 0.0
        %1171 = vmatprep.subr.mxu0 0.0
        %1172 = vmatpush1.msra.mxu0 0.0
        %1173 = vmatprep.subr.mxu0 0.0
        %1174 = vmatpush1.msra.mxu0 0.0
        %1175 = vmatprep.subr.mxu0 0.0
        %1176 = vmatpush1.msra.mxu0 0.0
        %1177 = vmatprep.subr.mxu0 0.0
        %1178 = vmatpush1.msra.mxu0 0.0
        %1179 = vmatprep.subr.mxu0 0.0
        %1180 = vmatpush1.msra.mxu0 0.0
        %1181 = vmatprep.subr.mxu0 0.0
        %1182 = vmatpush1.msra.mxu0 0.0
        %1183 = vmatprep.subr.mxu0 0.0
        %1184 = vmatpush1.msra.mxu0 0.0
        %1185 = vmatprep.subr.mxu0 0.0
        %1186 = vmatpush1.msra.mxu0 0.0
        %1187 = vmatprep.subr.mxu0 0.0
        %1188 = vmatpush1.msra.mxu0 0.0
        %1189 = vmatprep.subr.mxu0 0.0
        %1190 = vmatpush1.msra.mxu0 0.0
        %1191 = vmatprep.subr.mxu0 0.0
        %1192 = vmatpush1.msra.mxu0 0.0
        %1193 = vmatprep.subr.mxu0 0.0
        %1194 = vmatpush1.msra.mxu0 0.0
        %1195 = vmatprep.subr.mxu0 0.0
        %1196 = vmatpush1.msra.mxu0 0.0
        %1197 = vmatprep.subr.mxu0 0.0
        %1198 = vmatpush1.msra.mxu0 0.0
        %1199 = vmatprep.subr.mxu0 0.0
        %1200 = vmatpush1.msra.mxu0 0.0
        %1201 = vmatprep.subr.mxu0 0.0
        %1202 = vmatpush1.msra.mxu0 0.0
        %1203 = vmatprep.subr.mxu0 0.0
        %1204 = vmatpush1.msra.mxu0 0.0
        %1205 = vmatprep.mubr.f32.mxu0 0.0
        %1206 = vmatmul.mubr.f32.gmra.mrb[0].mxu0 %v1139
        %v1207 = vpop.f32.mrb[0].mxu0
        %v1208 = vadd.f32 0.0, %v1207
        %v1209 = vpop.f32.mrb[0].mxu0
        %1210 = vdwg.mxu0
        %1212 = vrot.lane.b32.xlu0 %v1056, 8
        %v1213 = vpop.permute.xlu0 %1212
        %1216 = vrot.lane.b32.xlu0 %v1132, 16
        %v1217 = vpop.permute.xlu0 %1216
        %1220 = vrot.lane.b32.xlu0 %v1208, 24
        %v1221 = vpop.permute.xlu0 %1220
        %v1223 = vsel %vm560, %v980, %v1213
        %vm1224 = vcmask 130048
        %v1225 = vsel %vm1224, %v1223, %v1217
        %vm1226 = vcmask 195584
        %v1227 = vsel %vm1226, %v1225, %v1221
        %v1228 = vld [vmem:[%s4] sm:$0xff]
        %v1229 = vld [vmem:[%s4 + $0x8] sm:$0xff]
        %v1230 = vld [vmem:[%s4 + $0x10] sm:$0xff]
        %v1231 = vld [vmem:[%s4 + $0x18] sm:$0xff]
        %v1233 = vsel %vm443, %v1227, 0
        %1235 = vmatprep.subr.mxu0 0.0
        %1236 = vmatpush1.msra.mxu0 %v1228
        %1237 = vmatprep.subr.mxu0 0.0
        %1238 = vmatpush1.msra.mxu0 %v1229
        %1239 = vmatprep.subr.mxu0 0.0
        %1240 = vmatpush1.msra.mxu0 %v1230
        %1241 = vmatprep.subr.mxu0 0.0
        %1242 = vmatpush1.msra.mxu0 %v1231
        %1243 = vmatprep.subr.mxu0 0.0
        %1244 = vmatpush1.msra.mxu0 0.0
        %1245 = vmatprep.subr.mxu0 0.0
        %1246 = vmatpush1.msra.mxu0 0.0
        %1247 = vmatprep.subr.mxu0 0.0
        %1248 = vmatpush1.msra.mxu0 0.0
        %1249 = vmatprep.subr.mxu0 0.0
        %1250 = vmatpush1.msra.mxu0 0.0
        %1251 = vmatprep.subr.mxu0 0.0
        %1252 = vmatpush1.msra.mxu0 0.0
        %1253 = vmatprep.subr.mxu0 0.0
        %1254 = vmatpush1.msra.mxu0 0.0
        %1255 = vmatprep.subr.mxu0 0.0
        %1256 = vmatpush1.msra.mxu0 0.0
        %1257 = vmatprep.subr.mxu0 0.0
        %1258 = vmatpush1.msra.mxu0 0.0
        %1259 = vmatprep.subr.mxu0 0.0
        %1260 = vmatpush1.msra.mxu0 0.0
        %1261 = vmatprep.subr.mxu0 0.0
        %1262 = vmatpush1.msra.mxu0 0.0
        %1263 = vmatprep.subr.mxu0 0.0
        %1264 = vmatpush1.msra.mxu0 0.0
        %1265 = vmatprep.subr.mxu0 0.0
        %1266 = vmatpush1.msra.mxu0 0.0
        %1267 = vmatprep.subr.mxu0 0.0
        %1268 = vmatpush1.msra.mxu0 0.0
        %1269 = vmatprep.subr.mxu0 0.0
        %1270 = vmatpush1.msra.mxu0 0.0
        %1271 = vmatprep.subr.mxu0 0.0
        %1272 = vmatpush1.msra.mxu0 0.0
        %1273 = vmatprep.subr.mxu0 0.0
        %1274 = vmatpush1.msra.mxu0 0.0
        %1275 = vmatprep.subr.mxu0 0.0
        %1276 = vmatpush1.msra.mxu0 0.0
        %1277 = vmatprep.subr.mxu0 0.0
        %1278 = vmatpush1.msra.mxu0 0.0
        %1279 = vmatprep.subr.mxu0 0.0
        %1280 = vmatpush1.msra.mxu0 0.0
        %1281 = vmatprep.subr.mxu0 0.0
        %1282 = vmatpush1.msra.mxu0 0.0
        %1283 = vmatprep.subr.mxu0 0.0
        %1284 = vmatpush1.msra.mxu0 0.0
        %1285 = vmatprep.subr.mxu0 0.0
        %1286 = vmatpush1.msra.mxu0 0.0
        %1287 = vmatprep.subr.mxu0 0.0
        %1288 = vmatpush1.msra.mxu0 0.0
        %1289 = vmatprep.subr.mxu0 0.0
        %1290 = vmatpush1.msra.mxu0 0.0
        %1291 = vmatprep.subr.mxu0 0.0
        %1292 = vmatpush1.msra.mxu0 0.0
        %1293 = vmatprep.subr.mxu0 0.0
        %1294 = vmatpush1.msra.mxu0 0.0
        %1295 = vmatprep.subr.mxu0 0.0
        %1296 = vmatpush1.msra.mxu0 0.0
        %1297 = vmatprep.subr.mxu0 0.0
        %1298 = vmatpush1.msra.mxu0 0.0
        %1299 = vmatprep.mubr.f32.mxu0 0.0
        %1300 = vmatmul.mubr.f32.gmra.mrb[0].mxu0 %v1233
        %v1301 = vpop.f32.mrb[0].mxu0
        %v1302 = vadd.f32 0.0, %v1301
        %v1303 = vpop.f32.mrb[0].mxu0
        %1304 = vdwg.mxu0
        %v1305 = vadd.f32 %v442, %v1302
        %v1306 = vld [vmem:[%s5] sm:$0x1]
        %v1308 = vlaneseq
        %v1309 = vshrl.u32 %v1308, 7
        %v1310 = vsub.s32 0, %v1309
        %v1311 = vrot.slane %v1306, %v1310
        %v1313 = vadd.f32 %v1305, %v1311
        %v1314 = vsel %vm443, %v1313, 0.0
        %1315 = vadd.xlane.f32.xlu0 %v1314
        %v1316 = vpop.xlane.xlu0 %1315
        %v1317 = vmul.f32 %v1316, %v447
        %v1318 = vsub.f32 %v1313, %v1317
        %v1319 = vmul.f32 %v1318, %v1318
        %v1320 = vsel %vm443, %v1319, 0.0
        %1321 = vadd.xlane.f32.xlu0 %v1320
        %v1322 = vpop.xlane.xlu0 %1321
        %v1323 = vmul.f32 %v1322, %v447
        %v1324 = vadd.f32 %v1323, 1e-05
        %v1325 = vrsqrt.pop %v1324
        %v1326 = vmul.f32 %v1318, %v1325
        %v1327 = vld [vmem:[%s6] sm:$0x1]
        %v1329 = vlaneseq
        %v1330 = vshrl.u32 %v1329, 7
        %v1331 = vsub.s32 0, %v1330
        %v1332 = vrot.slane %v1327, %v1331
        %v1334 = vmul.f32 %v1326, %v1332
        %v1335 = vld [vmem:[%s7] sm:$0x1]
        %v1337 = vlaneseq
        %v1338 = vshrl.u32 %v1337, 7
        %v1339 = vsub.s32 0, %v1338
        %v1340 = vrot.slane %v1335, %v1339
        %v1342 = vadd.f32 %v1334, %v1340
        %v1343 = vld [vmem:[%s8] sm:$0xff]
        %v1344 = vld [vmem:[%s8 + $0x8] sm:$0xff]
        %v1345 = vld [vmem:[%s8 + $0x10] sm:$0xff]
        %v1346 = vld [vmem:[%s8 + $0x18] sm:$0xff]
        %v1347 = vld [vmem:[#allocation5] sm:$0x1]
        %v1349 = vlaneseq
        %v1350 = vshrl.u32 %v1349, 7
        %v1351 = vsub.s32 0, %v1350
        %v1352 = vrot.slane %v1347, %v1351
        %v1355 = vsel %vm443, %v1342, 0
        %1357 = vmatprep.subr.mxu0 0.0
        %1358 = vmatpush1.msra.mxu0 %v1343
        %1359 = vmatprep.subr.mxu0 0.0
        %1360 = vmatpush1.msra.mxu0 %v1344
        %1361 = vmatprep.subr.mxu0 0.0
        %1362 = vmatpush1.msra.mxu0 %v1345
        %1363 = vmatprep.subr.mxu0 0.0
        %1364 = vmatpush1.msra.mxu0 %v1346
        %1365 = vmatprep.subr.mxu0 0.0
        %1366 = vmatpush1.msra.mxu0 0.0
        %1367 = vmatprep.subr.mxu0 0.0
        %1368 = vmatpush1.msra.mxu0 0.0
        %1369 = vmatprep.subr.mxu0 0.0
        %1370 = vmatpush1.msra.mxu0 0.0
        %1371 = vmatprep.subr.mxu0 0.0
        %1372 = vmatpush1.msra.mxu0 0.0
        %1373 = vmatprep.subr.mxu0 0.0
        %1374 = vmatpush1.msra.mxu0 0.0
        %1375 = vmatprep.subr.mxu0 0.0
        %1376 = vmatpush1.msra.mxu0 0.0
        %1377 = vmatprep.subr.mxu0 0.0
        %1378 = vmatpush1.msra.mxu0 0.0
        %1379 = vmatprep.subr.mxu0 0.0
        %1380 = vmatpush1.msra.mxu0 0.0
        %1381 = vmatprep.subr.mxu0 0.0
        %1382 = vmatpush1.msra.mxu0 0.0
        %1383 = vmatprep.subr.mxu0 0.0
        %1384 = vmatpush1.msra.mxu0 0.0
        %1385 = vmatprep.subr.mxu0 0.0
        %1386 = vmatpush1.msra.mxu0 0.0
        %1387 = vmatprep.subr.mxu0 0.0
        %1388 = vmatpush1.msra.mxu0 0.0
        %1389 = vmatprep.subr.mxu0 0.0
        %1390 = vmatpush1.msra.mxu0 0.0
        %1391 = vmatprep.subr.mxu0 0.0
        %1392 = vmatpush1.msra.mxu0 0.0
        %1393 = vmatprep.subr.mxu0 0.0
        %1394 = vmatpush1.msra.mxu0 0.0
        %1395 = vmatprep.subr.mxu0 0.0
        %1396 = vmatpush1.msra.mxu0 0.0
        %1397 = vmatprep.subr.mxu0 0.0
        %1398 = vmatpush1.msra.mxu0 0.0
        %1399 = vmatprep.subr.mxu0 0.0
        %1400 = vmatpush1.msra.mxu0 0.0
        %1401 = vmatprep.subr.mxu0 0.0
        %1402 = vmatpush1.msra.mxu0 0.0
        %1403 = vmatprep.subr.mxu0 0.0
        %1404 = vmatpush1.msra.mxu0 0.0
        %1405 = vmatprep.subr.mxu0 0.0
        %1406 = vmatpush1.msra.mxu0 0.0
        %1407 = vmatprep.subr.mxu0 0.0
        %1408 = vmatpush1.msra.mxu0 0.0
        %1409 = vmatprep.subr.mxu0 0.0
        %1410 = vmatpush1.msra.mxu0 0.0
        %1411 = vmatprep.subr.mxu0 0.0
        %1412 = vmatpush1.msra.mxu0 0.0
        %1413 = vmatprep.subr.mxu0 0.0
        %1414 = vmatpush1.msra.mxu0 0.0
        %1415 = vmatprep.subr.mxu0 0.0
        %1416 = vmatpush1.msra.mxu0 0.0
        %1417 = vmatprep.subr.mxu0 0.0
        %1418 = vmatpush1.msra.mxu0 0.0
        %1419 = vmatprep.subr.mxu0 0.0
        %1420 = vmatpush1.msra.mxu0 0.0
        %1421 = vmatprep.mubr.f32.mxu0 0.0
        %1422 = vmatmul.mubr.f32.gmra.mrb[0].mxu0 %v1355
        %v1423 = vpop.f32.mrb[0].mxu0
        %v1424 = vadd.f32 %v1352, %v1423
        %v1425 = vpop.f32.mrb[0].mxu0
        %1426 = vdwg.mxu0
        %v1427 = vmul.f32 %v1424, 0.5
        %v1428 = vmul.f32 %v1424, 0.044715
        %v1429 = vmul.f32 %v1428, %v1424
        %v1430 = vmul.f32 %v1429, %v1424
        %v1431 = vadd.f32 %v1424, %v1430
        %v1432 = vmul.f32 %v1431, 0.7978846
        %v1433 = vtanh.pop %v1432
        %v1434 = vadd.f32 %v1433, 1.0
        %v1435 = vmul.f32 %v1427, %v1434
        %v1436 = vld [vmem:[%s10] sm:$0xff]
        %v1437 = vld [vmem:[%s10 + $0x8] sm:$0xff]
        %v1438 = vld [vmem:[%s10 + $0x10] sm:$0xff]
        %v1439 = vld [vmem:[%s10 + $0x18] sm:$0xff]
        %v1440 = vld [vmem:[%s10 + $0x20] sm:$0xff]
        %v1441 = vld [vmem:[%s10 + $0x28] sm:$0xff]
        %v1442 = vld [vmem:[%s10 + $0x30] sm:$0xff]
        %v1443 = vld [vmem:[%s10 + $0x38] sm:$0xff]
        %v1444 = vld [vmem:[%s11] sm:$0x1]
        %v1446 = vlaneseq
        %v1447 = vshrl.u32 %v1446, 7
        %v1448 = vsub.s32 0, %v1447
        %v1449 = vrot.slane %v1444, %v1448
        %vm1451 = vcmask 523264
        %v1453 = vsel %vm1451, %v1435, 0
        %1455 = vmatprep.subr.mxu0 0.0
        %1456 = vmatpush1.msra.mxu0 %v1436
        %1457 = vmatprep.subr.mxu0 0.0
        %1458 = vmatpush1.msra.mxu0 %v1437
        %1459 = vmatprep.subr.mxu0 0.0
        %1460 = vmatpush1.msra.mxu0 %v1438
        %1461 = vmatprep.subr.mxu0 0.0
        %1462 = vmatpush1.msra.mxu0 %v1439
        %1463 = vmatprep.subr.mxu0 0.0
        %1464 = vmatpush1.msra.mxu0 %v1440
        %1465 = vmatprep.subr.mxu0 0.0
        %1466 = vmatpush1.msra.mxu0 %v1441
        %1467 = vmatprep.subr.mxu0 0.0
        %1468 = vmatpush1.msra.mxu0 %v1442
        %1469 = vmatprep.subr.mxu0 0.0
        %1470 = vmatpush1.msra.mxu0 %v1443
        %1471 = vmatprep.subr.mxu0 0.0
        %1472 = vmatpush1.msra.mxu0 0.0
        %1473 = vmatprep.subr.mxu0 0.0
        %1474 = vmatpush1.msra.mxu0 0.0
        %1475 = vmatprep.subr.mxu0 0.0
        %1476 = vmatpush1.msra.mxu0 0.0
        %1477 = vmatprep.subr.mxu0 0.0
        %1478 = vmatpush1.msra.mxu0 0.0
        %1479 = vmatprep.subr.mxu0 0.0
        %1480 = vmatpush1.msra.mxu0 0.0
        %1481 = vmatprep.subr.mxu0 0.0
        %1482 = vmatpush1.msra.mxu0 0.0
        %1483 = vmatprep.subr.mxu0 0.0
        %1484 = vmatpush1.msra.mxu0 0.0
        %1485 = vmatprep.subr.mxu0 0.0
        %1486 = vmatpush1.msra.mxu0 0.0
        %1487 = vmatprep.subr.mxu0 0.0
        %1488 = vmatpush1.msra.mxu0 0.0
        %1489 = vmatprep.subr.mxu0 0.0
        %1490 = vmatpush1.msra.mxu0 0.0
        %1491 = vmatprep.subr.mxu0 0.0
        %1492 = vmatpush1.msra.mxu0 0.0
        %1493 = vmatprep.subr.mxu0 0.0
        %1494 = vmatpush1.msra.mxu0 0.0
        %1495 = vmatprep.subr.mxu0 0.0
        %1496 = vmatpush1.msra.mxu0 0.0
        %1497 = vmatprep.subr.mxu0 0.0
        %1498 = vmatpush1.msra.mxu0 0.0
        %1499 = vmatprep.subr.mxu0 0.0
        %1500 = vmatpush1.msra.mxu0 0.0
        %1501 = vmatprep.subr.mxu0 0.0
        %1502 = vmatpush1.msra.mxu0 0.0
        %1503 = vmatprep.subr.mxu0 0.0
        %1504 = vmatpush1.msra.mxu0 0.0
        %1505 = vmatprep.subr.mxu0 0.0
        %1506 = vmatpush1.msra.mxu0 0.0
        %1507 = vmatprep.subr.mxu0 0.0
        %1508 = vmatpush1.msra.mxu0 0.0
        %1509 = vmatprep.subr.mxu0 0.0
        %1510 = vmatpush1.msra.mxu0 0.0
        %1511 = vmatprep.subr.mxu0 0.0
        %1512 = vmatpush1.msra.mxu0 0.0
        %1513 = vmatprep.subr.mxu0 0.0
        %1514 = vmatpush1.msra.mxu0 0.0
        %1515 = vmatprep.subr.mxu0 0.0
        %1516 = vmatpush1.msra.mxu0 0.0
        %1517 = vmatprep.subr.mxu0 0.0
        %1518 = vmatpush1.msra.mxu0 0.0
        %1519 = vmatprep.mubr.f32.mxu0 0.0
        %1520 = vmatmul.mubr.f32.gmra.mrb[0].mxu0 %v1453
        %v1521 = vpop.f32.mrb[0].mxu0
        %v1522 = vadd.f32 %v1449, %v1521
        %v1523 = vpop.f32.mrb[0].mxu0
        %1524 = vdwg.mxu0
        %v1525 = vadd.f32 %v1313, %v1522
        %1526 = vst.msk [vmem:[%s441] sm:$0xff] %vm443, %v1525
        %s1527 = sand.u32 %s295, 1
        %s1528 = scalar_lea.sflag [#allocation4], %s1527
        %s1529 = sand.u32 %s295, 1
        %s1530 = smul.addr %s1529, 8
        %s1531 = scalar_lea.vmem [#allocation7], %s1530
        // Predicated region
        $region77: #{tpu_custom_call.1} parent=67 // pred_check
          %p1532 = pneg %p305
        $region78: #{tpu_custom_call.1} parent=67 // pred_check_branch
          %1534 = sbr.rel (%p1532) target = $region80
        $region79: #{tpu_custom_call.1} parent=67 // pred_region
          %s1536 = ssub.s32 128, 128
          %1537 = vsyncadd %s1528, %s1536
          %s1538 = smul.addr %s30, 128
          %s1539 = scalar_lea.hbm %s12, %s1538
          %s1541 = sshll.u32 %s1531, 4
          %s1542 = int_to_ptr.vmem [resolvable:$true] %s1541
          %1544 = dma.vmem_to_hbm [thread:$0]  %s1542, 128, %s1539, %s1528
        $region80: #{tpu_custom_call.1} parent=67 // pred_fallthru
          _
      $region68: #{tpu_custom_call.1} parent=5 // pred_fallthru
        _
      %p1545 = scmp.le.s32.totalorder 2, %s25
      // Predicated region
      $region81: #{tpu_custom_call.1} parent=5 // pred_check
        %p1546 = pneg %p1545
      $region82: #{tpu_custom_call.1} parent=5 // pred_check_branch
        %1548 = sbr.rel (%p1546) target = $region84
      $region83: #{tpu_custom_call.1} parent=5 // pred_region
        %s1549 = ssub.s32 %s25, 2
        // Predicated region
        $region85: #{tpu_custom_call.1} parent=83 // pred_check
          %p1550 = pneg %p311
        $region86: #{tpu_custom_call.1} parent=83 // pred_check_branch
          %1552 = sbr.rel (%p1550) target = $region88
        $region87: #{tpu_custom_call.1} parent=83 // pred_region
          %s1553 = sand.u32 %s296, 1
          %s1554 = scalar_lea.sflag [#allocation4], %s1553
          %s1555 = sand.u32 %s296, 1
          %s1556 = smul.addr %s1555, 8
          %s1557 = scalar_lea.vmem [#allocation7], %s1556
          %1558 = dma.done %s1554, 128
        $region88: #{tpu_custom_call.1} parent=83 // pred_fallthru
          _
      $region84: #{tpu_custom_call.1} parent=5 // pred_fallthru
        _
    $region6: #{tpu_custom_call.1} parent=1 // loop_footer
      %s29 = sadd.s32 1, %s25
    $region7: #{tpu_custom_call.1} parent=1 // loop_footer_branch
      %24 = sbr.rel target = $region3
    $region8: #{tpu_custom_call.1} parent=1 // loop_exit
      _
    %1559 = vsyncpa [#allocation3], 1
    %s1560 = scalar_lea.sflag [#allocation3], 1
    %1561 = vsyncpa %s1560, 1
    %1562 = vsyncpa [#allocation6], 1
    %1563 = vsyncpa [#allocation4], 1
    %s1564 = scalar_lea.sflag [#allocation4], 1
    %1565 = vsyncpa %s1564, 1

</llo_original>
